<compile_context>
chip_gen: v5e
topology: v5e:2x2
jax: 0.10.0
libtpu: 0.0.40
codegen_flags: <defaults>
</compile_context>

<pallas_src>
import math
from functools import partial

import jax
import jax.numpy as jnp
from jax.experimental import pallas as pl
from jax.experimental.pallas import tpu as pltpu

# ---- module constants (from the PyTorch source) ----
N_EMBD = 128
NUM_HEADS = 4
HEAD_SIZE = N_EMBD // NUM_HEADS  # 32


# ----------------------------------------------------------------------------
# Fused kernel: one program per batch-block.
#   x_ref    : (Bblk, T, C)
#   wqkv_ref : (C, 3*H*hs)   packed [Wq_all | Wk_all | Wv_all], heads contiguous
#   wp_ref   : (H*hs, C)
#   bp_ref   : (1, C)
#   out_ref  : (Bblk, T, C)
#   qkv_scr  : (Bblk*T, 3*H*hs) VMEM scratch
#   cat_scr  : (Bblk*T, H*hs)   VMEM scratch (concatenated head outputs)
# ----------------------------------------------------------------------------
def mha_fused_kernel(x_ref, wqkv_ref, wp_ref, bp_ref, out_ref, qkv_scr, cat_scr,
                     *, cast_bf16):
    bblk, t, c = x_ref.shape
    H, hs = NUM_HEADS, HEAD_SIZE
    scale = hs ** -0.5
    mm_dtype = jnp.bfloat16 if cast_bf16 else jnp.float32

    # Collapse the batch block so the QKV projection is one big lane-dense
    # matmul (Bblk*T, 128) @ (128, 384); result lands in VMEM scratch so the
    # per-head 32-lane slices are plain vector loads, not lane extracts.
    x2d = x_ref[...].reshape(bblk * t, c)
    qkv_scr[...] = jnp.dot(x2d.astype(mm_dtype), wqkv_ref[...].astype(mm_dtype),
                           preferred_element_type=jnp.float32)

    row = jax.lax.broadcasted_iota(jnp.int32, (t, t), 0)
    col = jax.lax.broadcasted_iota(jnp.int32, (t, t), 1)
    causal = row >= col

    for b in range(bblk):              # static unroll (tiny trip counts)
        r0 = b * t
        for h in range(H):
            q = qkv_scr[r0:r0 + t, h * hs:(h + 1) * hs]                  # (T, hs)
            k = qkv_scr[r0:r0 + t, (H + h) * hs:(H + h + 1) * hs]        # (T, hs)
            v = qkv_scr[r0:r0 + t, (2 * H + h) * hs:(2 * H + h + 1) * hs]

            # contract last dims of q and k -> no explicit transpose
            s = jax.lax.dot_general(
                q.astype(mm_dtype), k.astype(mm_dtype),
                (((1,), (1,)), ((), ())),
                preferred_element_type=jnp.float32) * scale              # (T, T) f32

            # causal mask: finite large-negative is NaN-safe if tiles/rows ever
            # get fully masked in a future T-tiled variant.
            s = jnp.where(causal, s, -1e30)

            # softmax entirely in f32; EXACT reciprocal (approx=True was the
            # source of the previous tolerance failure).
            m = jnp.max(s, axis=-1, keepdims=True)
            p = jnp.exp(s - m)
            p = p * (1.0 / jnp.sum(p, axis=-1, keepdims=True))

            # stream this head's output straight into its column slice of the
            # concatenated scratch (no head_outs list, no jnp.concatenate).
            cat_scr[r0:r0 + t, h * hs:(h + 1) * hs] = jnp.dot(
                p.astype(mm_dtype), v.astype(mm_dtype),
                preferred_element_type=jnp.float32)

    # lane-dense (Bblk*T, 128) projection + bias, f32 accumulation
    y = jnp.dot(cat_scr[...].astype(mm_dtype), wp_ref[...].astype(mm_dtype),
                preferred_element_type=jnp.float32) + bp_ref[...]
    out_ref[...] = y.reshape(bblk, t, c).astype(out_ref.dtype)


# ----------------------------------------------------------------------------
# Host-side weight packing (done once): per-head (H, C, hs) -> (C, 3*H*hs)
# with column block [h*hs:(h+1)*hs] of each third equal to W*_h.
# ----------------------------------------------------------------------------
def pack_qkv_weights(wq, wk, wv):
    H, C, hs = wq.shape

    def flat(w):
        return jnp.transpose(w, (1, 0, 2)).reshape(C, H * hs)

    return jnp.concatenate([flat(wq), flat(wk), flat(wv)], axis=1)    # (C, 3*H*hs)


# ----------------------------------------------------------------------------
# Full forward: matches MultiHeadAttention.forward (eval mode)
#   bblk      : batch elements folded into one grid step (static)
#   cast_bf16 : cast MXU operands to bf16 (f32 accumulation / f32 softmax)
# ----------------------------------------------------------------------------
@partial(jax.jit, static_argnames=("bblk", "cast_bf16"))
def multi_head_attention(x, wqkv, wp, bp, *, bblk=1, cast_bf16=False):
    B, T, C = x.shape
    assert B % bblk == 0, (B, bblk)
    nb = B // bblk
    Hhs = wp.shape[0]  # H * head_size

    # advisory cost estimate for XLA scheduling
    flops = (2 * B * T * C * (3 * Hhs)                      # fused QKV projection
             + 2 * B * NUM_HEADS * T * T * HEAD_SIZE * 2    # q@k^T and p@v
             + 2 * B * T * Hhs * C)                         # output projection
    bytes_accessed = 4 * (x.size + wqkv.size + wp.size + bp.size + B * T * C)

    kernel = partial(mha_fused_kernel, cast_bf16=cast_bf16)

    return pl.pallas_call(
        kernel,
        out_shape=jax.ShapeDtypeStruct((B, T, C), x.dtype),
        grid=(nb,),
        in_specs=[
            pl.BlockSpec((bblk, T, C), lambda i: (i, 0, 0)),
            pl.BlockSpec(wqkv.shape, lambda i: (0, 0)),   # weights grid-invariant
            pl.BlockSpec(wp.shape, lambda i: (0, 0)),
            pl.BlockSpec(bp.shape, lambda i: (0, 0)),
        ],
        out_specs=pl.BlockSpec((bblk, T, C), lambda i: (i, 0, 0)),
        scratch_shapes=[
            pltpu.VMEM((bblk * T, 3 * Hhs), jnp.float32),   # QKV scratch
            pltpu.VMEM((bblk * T, Hhs), jnp.float32),       # concat-head scratch
        ],
        compiler_params=pltpu.CompilerParams(
            dimension_semantics=("parallel",)),             # v7x: one step per TC
        cost_estimate=pl.CostEstimate(
            flops=flops,
            transcendentals=B * NUM_HEADS * T * T,          # exp in softmax
            bytes_accessed=bytes_accessed),
    )(x, wqkv, wp, bp)


# ----------------------------------------------------------------------------
# Pure-JAX reference (mirrors the PyTorch math) for a sanity check
# ----------------------------------------------------------------------------
def reference(x, wq, wk, wv, wp, bp):
    B, T, C = x.shape
    H, _, hs = wq.shape
    outs = []
    for h in range(H):
        q = x @ wq[h]
        k = x @ wk[h]
        v = x @ wv[h]
        wei = (q @ jnp.swapaxes(k, -2, -1)) * (hs ** -0.5)
        mask = jnp.tril(jnp.ones((T, T), dtype=bool))
        wei = jnp.where(mask, wei, -jnp.inf)
        wei = jax.nn.softmax(wei, axis=-1)
        outs.append(wei @ v)
    cat = jnp.concatenate(outs, axis=-1)
    return cat @ wp + bp[0]


if __name__ == "__main__":
    key = jax.random.PRNGKey(0)
    B, T = 4, 16  # T <= block_size(256); T multiple of 8 for f32 sublane tiling

    k0, k1, k2, k3, k4, k5 = jax.random.split(key, 6)
    x = jax.random.normal(k0, (B, T, N_EMBD), dtype=jnp.float32)

    # deterministic parameter init (shapes from the module __init__)
    scale_in = 1.0 / math.sqrt(N_EMBD)
    wq = jax.random.normal(k1, (NUM_HEADS, N_EMBD, HEAD_SIZE), jnp.float32) * scale_in
    wk = jax.random.normal(k2, (NUM_HEADS, N_EMBD, HEAD_SIZE), jnp.float32) * scale_in
    wv = jax.random.normal(k3, (NUM_HEADS, N_EMBD, HEAD_SIZE), jnp.float32) * scale_in
    scale_p = 1.0 / math.sqrt(NUM_HEADS * HEAD_SIZE)
    wp = jax.random.normal(k4, (NUM_HEADS * HEAD_SIZE, N_EMBD), jnp.float32) * scale_p
    bp = jax.random.normal(k5, (1, N_EMBD), jnp.float32) * scale_p

    # pack Q/K/V weights once on the host
    wqkv = pack_qkv_weights(wq, wk, wv)                      # (128, 384)

    # Batch folding: amortize per-grid-step overhead (v5e/v6e single TC) while
    # keeping >= 2 "parallel" grid steps so both v7x TensorCores get a block.
    bblk = max(1, B // 2)                                    # -> grid=(2,)

    ref = reference(x, wq, wk, wv, wp, bp)

    # --- f32-operand path (correctness gate) ---
    out = multi_head_attention(x, wqkv, wp, bp, bblk=bblk, cast_bf16=False)
    out = jax.block_until_ready(out)
    assert out.shape == (B, T, N_EMBD), out.shape
    max_err = float(jnp.max(jnp.abs(out - ref)))
    # In interpret mode this error is ~1e-6 (exact f32 softmax, exact division).
    # On real TPUs, f32 matmuls (in both the XLA reference and the Mosaic kernel)
    # may execute in reduced bf16-pass precision by default, so the bound covers
    # that documented behavior.
    assert jnp.allclose(out, ref, atol=3e-2, rtol=3e-2), max_err

    # --- bf16-operand path (perf-review item: bf16-native MXU on v6e/v7x) ---
    out_bf16 = multi_head_attention(x, wqkv, wp, bp, bblk=bblk, cast_bf16=True)
    out_bf16 = jax.block_until_ready(out_bf16)
    assert bool(jnp.all(jnp.isfinite(out_bf16)))
    err_bf16 = float(jnp.max(jnp.abs(out_bf16 - ref)))
    # Coarse sanity bound only: bf16 operand rounding at these O(1) magnitudes
    # measures ~1e-2 abs error; softmax/accumulation stay f32.
    assert err_bf16 < 0.25, err_bf16

    print("KERNEL_OK")
</pallas_src>

<mosaic_0001>
module attributes {stable_mosaic.version = 11 : i64} {
  func.func @mha_fused_kernel(%arg0: i32, %arg1: memref<2x16x128xf32, #tpu.memory_space<vmem>>, %arg2: memref<128x384xf32, #tpu.memory_space<vmem>>, %arg3: memref<128x128xf32, #tpu.memory_space<vmem>>, %arg4: memref<1x128xf32, #tpu.memory_space<vmem>>, %arg5: memref<2x16x128xf32, #tpu.memory_space<vmem>>, %arg6: memref<32x384xf32, #tpu.memory_space<vmem>>, %arg7: memref<32x128xf32, #tpu.memory_space<vmem>>) attributes {dimension_semantics = [#tpu.dimension_semantics<parallel>], iteration_bounds = array<i64: 2>, scalar_prefetch = 0 : i64, scratch_operands = 2 : i64, tpu.core_type = #tpu.core_type<tc>, window_params = [{transform_indices = @transform_0, window_bounds = array<i64: 2, 16, 128>}, {pipeline_mode = #tpu.pipeline_mode<synchronous>, transform_indices = @transform_1, window_bounds = array<i64: 128, 384>}, {pipeline_mode = #tpu.pipeline_mode<synchronous>, transform_indices = @transform_2, window_bounds = array<i64: 128, 128>}, {pipeline_mode = #tpu.pipeline_mode<synchronous>, transform_indices = @transform_3, window_bounds = array<i64: 1, 128>}, {transform_indices = @transform_4, window_bounds = array<i64: 2, 16, 128>}]} {
    %c0 = arith.constant 0 : index
    %c0_0 = arith.constant 0 : index
    %c0_1 = arith.constant 0 : index
    %0 = vector.load %arg1[%c0, %c0_0, %c0_1] : memref<2x16x128xf32, #tpu.memory_space<vmem>>, vector<2x16x128xf32>
    %1 = vector.shape_cast %0 : vector<2x16x128xf32> to vector<32x128xf32>
    %c0_2 = arith.constant 0 : index
    %c0_3 = arith.constant 0 : index
    %2 = vector.load %arg2[%c0_2, %c0_3] : memref<128x384xf32, #tpu.memory_space<vmem>>, vector<128x384xf32>
    %cst = arith.constant dense<0.000000e+00> : vector<32x384xf32>
    %3 = tpu.matmul %1, %2, %cst {dimension_numbers = #tpu.dot_dimension_numbers<[1], [0], [0], [1], [0, 0, 1, 1], [], []>} : vector<32x128xf32>, vector<128x384xf32>, vector<32x384xf32> -> vector<32x384xf32>
    %c0_4 = arith.constant 0 : index
    %c0_5 = arith.constant 0 : index
    %4 = vector.load %arg6[%c0_4, %c0_5] : memref<32x384xf32, #tpu.memory_space<vmem>>, vector<32x384xf32>
    tpu.vector_store %arg6[%c0_4, %c0_5], %3 {strides = array<i32>} : memref<32x384xf32, #tpu.memory_space<vmem>>, vector<32x384xf32>,
    %5 = tpu.iota {dimensions = array<i32: 0>} : vector<16x16xi32>
    %6 = tpu.iota {dimensions = array<i32: 1>} : vector<16x16xi32>
    %7 = arith.cmpi sge, %5, %6 : vector<16x16xi32>
    %c0_6 = arith.constant 0 : index
    %c0_7 = arith.constant 0 : index
    %8 = vector.load %arg6[%c0_6, %c0_7] : memref<32x384xf32, #tpu.memory_space<vmem>>, vector<16x32xf32>
    %c0_8 = arith.constant 0 : index
    %c128 = arith.constant 128 : index
    %9 = vector.load %arg6[%c0_8, %c128] : memref<32x384xf32, #tpu.memory_space<vmem>>, vector<16x32xf32>
    %c0_9 = arith.constant 0 : index
    %c256 = arith.constant 256 : index
    %10 = vector.load %arg6[%c0_9, %c256] : memref<32x384xf32, #tpu.memory_space<vmem>>, vector<16x32xf32>
    %cst_10 = arith.constant dense<0.000000e+00> : vector<16x16xf32>
    %11 = tpu.matmul %8, %9, %cst_10 {dimension_numbers = #tpu.dot_dimension_numbers<[1], [1], [0], [0], [0, 0, 1, 0], [], []>} : vector<16x32xf32>, vector<16x32xf32>, vector<16x16xf32> -> vector<16x16xf32>
    %cst_11 = arith.constant 0.176776692 : f32
    %12 = vector.broadcast %cst_11 : f32 to vector<16x16xf32>
    %13 = arith.mulf %11, %12 : vector<16x16xf32>
    %cst_12 = arith.constant -1.000000e+30 : f32
    %14 = vector.broadcast %cst_12 : f32 to vector<16x16xf32>
    %15 = arith.select %7, %13, %14 : vector<16x16xi1>, vector<16x16xf32>
    %cst_13 = arith.constant dense<0xFF800000> : vector<16xf32>
    %16 = vector.multi_reduction <maximumf>, %15, %cst_13 [1] : vector<16x16xf32> to vector<16xf32>
    %17 = vector.shape_cast %16 : vector<16xf32> to vector<16x1xf32>
    %18 = vector.broadcast %17 : vector<16x1xf32> to vector<16x16xf32>
    %19 = arith.subf %15, %18 : vector<16x16xf32>
    %20 = math.exp %19 : vector<16x16xf32>
    %cst_14 = arith.constant dense<0.000000e+00> : vector<16xf32>
    %21 = vector.multi_reduction <add>, %20, %cst_14 [1] : vector<16x16xf32> to vector<16xf32>
    %22 = vector.shape_cast %21 : vector<16xf32> to vector<16x1xf32>
    %cst_15 = arith.constant 1.000000e+00 : f32
    %23 = vector.broadcast %cst_15 : f32 to vector<16x1xf32>
    %24 = arith.divf %23, %22 : vector<16x1xf32>
    %25 = vector.broadcast %24 : vector<16x1xf32> to vector<16x16xf32>
    %26 = arith.mulf %20, %25 : vector<16x16xf32>
    %cst_16 = arith.constant dense<0.000000e+00> : vector<16x32xf32>
    %27 = tpu.matmul %26, %10, %cst_16 {dimension_numbers = #tpu.dot_dimension_numbers<[1], [0], [0], [1], [0, 0, 1, 1], [], []>} : vector<16x16xf32>, vector<16x32xf32>, vector<16x32xf32> -> vector<16x32xf32>
    %c0_17 = arith.constant 0 : index
    %c0_18 = arith.constant 0 : index
    %28 = vector.load %arg7[%c0_17, %c0_18] : memref<32x128xf32, #tpu.memory_space<vmem>>, vector<16x32xf32>
    tpu.vector_store %arg7[%c0_17, %c0_18], %27 {strides = array<i32>} : memref<32x128xf32, #tpu.memory_space<vmem>>, vector<16x32xf32>,
    %c0_19 = arith.constant 0 : index
    %c32 = arith.constant 32 : index
    %29 = vector.load %arg6[%c0_19, %c32] : memref<32x384xf32, #tpu.memory_space<vmem>>, vector<16x32xf32>
    %c0_20 = arith.constant 0 : index
    %c160 = arith.constant 160 : index
    %30 = vector.load %arg6[%c0_20, %c160] : memref<32x384xf32, #tpu.memory_space<vmem>>, vector<16x32xf32>
    %c0_21 = arith.constant 0 : index
    %c288 = arith.constant 288 : index
    %31 = vector.load %arg6[%c0_21, %c288] : memref<32x384xf32, #tpu.memory_space<vmem>>, vector<16x32xf32>
    %cst_22 = arith.constant dense<0.000000e+00> : vector<16x16xf32>
    %32 = tpu.matmul %29, %30, %cst_22 {dimension_numbers = #tpu.dot_dimension_numbers<[1], [1], [0], [0], [0, 0, 1, 0], [], []>} : vector<16x32xf32>, vector<16x32xf32>, vector<16x16xf32> -> vector<16x16xf32>
    %cst_23 = arith.constant 0.176776692 : f32
    %33 = vector.broadcast %cst_23 : f32 to vector<16x16xf32>
    %34 = arith.mulf %32, %33 : vector<16x16xf32>
    %cst_24 = arith.constant -1.000000e+30 : f32
    %35 = vector.broadcast %cst_24 : f32 to vector<16x16xf32>
    %36 = arith.select %7, %34, %35 : vector<16x16xi1>, vector<16x16xf32>
    %cst_25 = arith.constant dense<0xFF800000> : vector<16xf32>
    %37 = vector.multi_reduction <maximumf>, %36, %cst_25 [1] : vector<16x16xf32> to vector<16xf32>
    %38 = vector.shape_cast %37 : vector<16xf32> to vector<16x1xf32>
    %39 = vector.broadcast %38 : vector<16x1xf32> to vector<16x16xf32>
    %40 = arith.subf %36, %39 : vector<16x16xf32>
    %41 = math.exp %40 : vector<16x16xf32>
    %cst_26 = arith.constant dense<0.000000e+00> : vector<16xf32>
    %42 = vector.multi_reduction <add>, %41, %cst_26 [1] : vector<16x16xf32> to vector<16xf32>
    %43 = vector.shape_cast %42 : vector<16xf32> to vector<16x1xf32>
    %cst_27 = arith.constant 1.000000e+00 : f32
    %44 = vector.broadcast %cst_27 : f32 to vector<16x1xf32>
    %45 = arith.divf %44, %43 : vector<16x1xf32>
    %46 = vector.broadcast %45 : vector<16x1xf32> to vector<16x16xf32>
    %47 = arith.mulf %41, %46 : vector<16x16xf32>
    %cst_28 = arith.constant dense<0.000000e+00> : vector<16x32xf32>
    %48 = tpu.matmul %47, %31, %cst_28 {dimension_numbers = #tpu.dot_dimension_numbers<[1], [0], [0], [1], [0, 0, 1, 1], [], []>} : vector<16x16xf32>, vector<16x32xf32>, vector<16x32xf32> -> vector<16x32xf32>
    %c0_29 = arith.constant 0 : index
    %c32_30 = arith.constant 32 : index
    %49 = vector.load %arg7[%c0_29, %c32_30] : memref<32x128xf32, #tpu.memory_space<vmem>>, vector<16x32xf32>
    tpu.vector_store %arg7[%c0_29, %c32_30], %48 {strides = array<i32>} : memref<32x128xf32, #tpu.memory_space<vmem>>, vector<16x32xf32>,
    %c0_31 = arith.constant 0 : index
    %c64 = arith.constant 64 : index
    %50 = vector.load %arg6[%c0_31, %c64] : memref<32x384xf32, #tpu.memory_space<vmem>>, vector<16x32xf32>
    %c0_32 = arith.constant 0 : index
    %c192 = arith.constant 192 : index
    %51 = vector.load %arg6[%c0_32, %c192] : memref<32x384xf32, #tpu.memory_space<vmem>>, vector<16x32xf32>
    %c0_33 = arith.constant 0 : index
    %c320 = arith.constant 320 : index
    %52 = vector.load %arg6[%c0_33, %c320] : memref<32x384xf32, #tpu.memory_space<vmem>>, vector<16x32xf32>
    %cst_34 = arith.constant dense<0.000000e+00> : vector<16x16xf32>
    %53 = tpu.matmul %50, %51, %cst_34 {dimension_numbers = #tpu.dot_dimension_numbers<[1], [1], [0], [0], [0, 0, 1, 0], [], []>} : vector<16x32xf32>, vector<16x32xf32>, vector<16x16xf32> -> vector<16x16xf32>
    %cst_35 = arith.constant 0.176776692 : f32
    %54 = vector.broadcast %cst_35 : f32 to vector<16x16xf32>
    %55 = arith.mulf %53, %54 : vector<16x16xf32>
    %cst_36 = arith.constant -1.000000e+30 : f32
    %56 = vector.broadcast %cst_36 : f32 to vector<16x16xf32>
    %57 = arith.select %7, %55, %56 : vector<16x16xi1>, vector<16x16xf32>
    %cst_37 = arith.constant dense<0xFF800000> : vector<16xf32>
    %58 = vector.multi_reduction <maximumf>, %57, %cst_37 [1] : vector<16x16xf32> to vector<16xf32>
    %59 = vector.shape_cast %58 : vector<16xf32> to vector<16x1xf32>
    %60 = vector.broadcast %59 : vector<16x1xf32> to vector<16x16xf32>
    %61 = arith.subf %57, %60 : vector<16x16xf32>
    %62 = math.exp %61 : vector<16x16xf32>
    %cst_38 = arith.constant dense<0.000000e+00> : vector<16xf32>
    %63 = vector.multi_reduction <add>, %62, %cst_38 [1] : vector<16x16xf32> to vector<16xf32>
    %64 = vector.shape_cast %63 : vector<16xf32> to vector<16x1xf32>
    %cst_39 = arith.constant 1.000000e+00 : f32
    %65 = vector.broadcast %cst_39 : f32 to vector<16x1xf32>
    %66 = arith.divf %65, %64 : vector<16x1xf32>
    %67 = vector.broadcast %66 : vector<16x1xf32> to vector<16x16xf32>
    %68 = arith.mulf %62, %67 : vector<16x16xf32>
    %cst_40 = arith.constant dense<0.000000e+00> : vector<16x32xf32>
    %69 = tpu.matmul %68, %52, %cst_40 {dimension_numbers = #tpu.dot_dimension_numbers<[1], [0], [0], [1], [0, 0, 1, 1], [], []>} : vector<16x16xf32>, vector<16x32xf32>, vector<16x32xf32> -> vector<16x32xf32>
    %c0_41 = arith.constant 0 : index
    %c64_42 = arith.constant 64 : index
    %70 = vector.load %arg7[%c0_41, %c64_42] : memref<32x128xf32, #tpu.memory_space<vmem>>, vector<16x32xf32>
    tpu.vector_store %arg7[%c0_41, %c64_42], %69 {strides = array<i32>} : memref<32x128xf32, #tpu.memory_space<vmem>>, vector<16x32xf32>,
    %c0_43 = arith.constant 0 : index
    %c96 = arith.constant 96 : index
    %71 = vector.load %arg6[%c0_43, %c96] : memref<32x384xf32, #tpu.memory_space<vmem>>, vector<16x32xf32>
    %c0_44 = arith.constant 0 : index
    %c224 = arith.constant 224 : index
    %72 = vector.load %arg6[%c0_44, %c224] : memref<32x384xf32, #tpu.memory_space<vmem>>, vector<16x32xf32>
    %c0_45 = arith.constant 0 : index
    %c352 = arith.constant 352 : index
    %73 = vector.load %arg6[%c0_45, %c352] : memref<32x384xf32, #tpu.memory_space<vmem>>, vector<16x32xf32>
    %cst_46 = arith.constant dense<0.000000e+00> : vector<16x16xf32>
    %74 = tpu.matmul %71, %72, %cst_46 {dimension_numbers = #tpu.dot_dimension_numbers<[1], [1], [0], [0], [0, 0, 1, 0], [], []>} : vector<16x32xf32>, vector<16x32xf32>, vector<16x16xf32> -> vector<16x16xf32>
    %cst_47 = arith.constant 0.176776692 : f32
    %75 = vector.broadcast %cst_47 : f32 to vector<16x16xf32>
    %76 = arith.mulf %74, %75 : vector<16x16xf32>
    %cst_48 = arith.constant -1.000000e+30 : f32
    %77 = vector.broadcast %cst_48 : f32 to vector<16x16xf32>
    %78 = arith.select %7, %76, %77 : vector<16x16xi1>, vector<16x16xf32>
    %cst_49 = arith.constant dense<0xFF800000> : vector<16xf32>
    %79 = vector.multi_reduction <maximumf>, %78, %cst_49 [1] : vector<16x16xf32> to vector<16xf32>
    %80 = vector.shape_cast %79 : vector<16xf32> to vector<16x1xf32>
    %81 = vector.broadcast %80 : vector<16x1xf32> to vector<16x16xf32>
    %82 = arith.subf %78, %81 : vector<16x16xf32>
    %83 = math.exp %82 : vector<16x16xf32>
    %cst_50 = arith.constant dense<0.000000e+00> : vector<16xf32>
    %84 = vector.multi_reduction <add>, %83, %cst_50 [1] : vector<16x16xf32> to vector<16xf32>
    %85 = vector.shape_cast %84 : vector<16xf32> to vector<16x1xf32>
    %cst_51 = arith.constant 1.000000e+00 : f32
    %86 = vector.broadcast %cst_51 : f32 to vector<16x1xf32>
    %87 = arith.divf %86, %85 : vector<16x1xf32>
    %88 = vector.broadcast %87 : vector<16x1xf32> to vector<16x16xf32>
    %89 = arith.mulf %83, %88 : vector<16x16xf32>
    %cst_52 = arith.constant dense<0.000000e+00> : vector<16x32xf32>
    %90 = tpu.matmul %89, %73, %cst_52 {dimension_numbers = #tpu.dot_dimension_numbers<[1], [0], [0], [1], [0, 0, 1, 1], [], []>} : vector<16x16xf32>, vector<16x32xf32>, vector<16x32xf32> -> vector<16x32xf32>
    %c0_53 = arith.constant 0 : index
    %c96_54 = arith.constant 96 : index
    %91 = vector.load %arg7[%c0_53, %c96_54] : memref<32x128xf32, #tpu.memory_space<vmem>>, vector<16x32xf32>
    tpu.vector_store %arg7[%c0_53, %c96_54], %90 {strides = array<i32>} : memref<32x128xf32, #tpu.memory_space<vmem>>, vector<16x32xf32>,
    %c16 = arith.constant 16 : index
    %c0_55 = arith.constant 0 : index
    %92 = vector.load %arg6[%c16, %c0_55] : memref<32x384xf32, #tpu.memory_space<vmem>>, vector<16x32xf32>
    %c16_56 = arith.constant 16 : index
    %c128_57 = arith.constant 128 : index
    %93 = vector.load %arg6[%c16_56, %c128_57] : memref<32x384xf32, #tpu.memory_space<vmem>>, vector<16x32xf32>
    %c16_58 = arith.constant 16 : index
    %c256_59 = arith.constant 256 : index
    %94 = vector.load %arg6[%c16_58, %c256_59] : memref<32x384xf32, #tpu.memory_space<vmem>>, vector<16x32xf32>
    %cst_60 = arith.constant dense<0.000000e+00> : vector<16x16xf32>
    %95 = tpu.matmul %92, %93, %cst_60 {dimension_numbers = #tpu.dot_dimension_numbers<[1], [1], [0], [0], [0, 0, 1, 0], [], []>} : vector<16x32xf32>, vector<16x32xf32>, vector<16x16xf32> -> vector<16x16xf32>
    %cst_61 = arith.constant 0.176776692 : f32
    %96 = vector.broadcast %cst_61 : f32 to vector<16x16xf32>
    %97 = arith.mulf %95, %96 : vector<16x16xf32>
    %cst_62 = arith.constant -1.000000e+30 : f32
    %98 = vector.broadcast %cst_62 : f32 to vector<16x16xf32>
    %99 = arith.select %7, %97, %98 : vector<16x16xi1>, vector<16x16xf32>
    %cst_63 = arith.constant dense<0xFF800000> : vector<16xf32>
    %100 = vector.multi_reduction <maximumf>, %99, %cst_63 [1] : vector<16x16xf32> to vector<16xf32>
    %101 = vector.shape_cast %100 : vector<16xf32> to vector<16x1xf32>
    %102 = vector.broadcast %101 : vector<16x1xf32> to vector<16x16xf32>
    %103 = arith.subf %99, %102 : vector<16x16xf32>
    %104 = math.exp %103 : vector<16x16xf32>
    %cst_64 = arith.constant dense<0.000000e+00> : vector<16xf32>
    %105 = vector.multi_reduction <add>, %104, %cst_64 [1] : vector<16x16xf32> to vector<16xf32>
    %106 = vector.shape_cast %105 : vector<16xf32> to vector<16x1xf32>
    %cst_65 = arith.constant 1.000000e+00 : f32
    %107 = vector.broadcast %cst_65 : f32 to vector<16x1xf32>
    %108 = arith.divf %107, %106 : vector<16x1xf32>
    %109 = vector.broadcast %108 : vector<16x1xf32> to vector<16x16xf32>
    %110 = arith.mulf %104, %109 : vector<16x16xf32>
    %cst_66 = arith.constant dense<0.000000e+00> : vector<16x32xf32>
    %111 = tpu.matmul %110, %94, %cst_66 {dimension_numbers = #tpu.dot_dimension_numbers<[1], [0], [0], [1], [0, 0, 1, 1], [], []>} : vector<16x16xf32>, vector<16x32xf32>, vector<16x32xf32> -> vector<16x32xf32>
    %c16_67 = arith.constant 16 : index
    %c0_68 = arith.constant 0 : index
    %112 = vector.load %arg7[%c16_67, %c0_68] : memref<32x128xf32, #tpu.memory_space<vmem>>, vector<16x32xf32>
    tpu.vector_store %arg7[%c16_67, %c0_68], %111 {strides = array<i32>} : memref<32x128xf32, #tpu.memory_space<vmem>>, vector<16x32xf32>,
    %c16_69 = arith.constant 16 : index
    %c32_70 = arith.constant 32 : index
    %113 = vector.load %arg6[%c16_69, %c32_70] : memref<32x384xf32, #tpu.memory_space<vmem>>, vector<16x32xf32>
    %c16_71 = arith.constant 16 : index
    %c160_72 = arith.constant 160 : index
    %114 = vector.load %arg6[%c16_71, %c160_72] : memref<32x384xf32, #tpu.memory_space<vmem>>, vector<16x32xf32>
    %c16_73 = arith.constant 16 : index
    %c288_74 = arith.constant 288 : index
    %115 = vector.load %arg6[%c16_73, %c288_74] : memref<32x384xf32, #tpu.memory_space<vmem>>, vector<16x32xf32>
    %cst_75 = arith.constant dense<0.000000e+00> : vector<16x16xf32>
    %116 = tpu.matmul %113, %114, %cst_75 {dimension_numbers = #tpu.dot_dimension_numbers<[1], [1], [0], [0], [0, 0, 1, 0], [], []>} : vector<16x32xf32>, vector<16x32xf32>, vector<16x16xf32> -> vector<16x16xf32>
    %cst_76 = arith.constant 0.176776692 : f32
    %117 = vector.broadcast %cst_76 : f32 to vector<16x16xf32>
    %118 = arith.mulf %116, %117 : vector<16x16xf32>
    %cst_77 = arith.constant -1.000000e+30 : f32
    %119 = vector.broadcast %cst_77 : f32 to vector<16x16xf32>
    %120 = arith.select %7, %118, %119 : vector<16x16xi1>, vector<16x16xf32>
    %cst_78 = arith.constant dense<0xFF800000> : vector<16xf32>
    %121 = vector.multi_reduction <maximumf>, %120, %cst_78 [1] : vector<16x16xf32> to vector<16xf32>
    %122 = vector.shape_cast %121 : vector<16xf32> to vector<16x1xf32>
    %123 = vector.broadcast %122 : vector<16x1xf32> to vector<16x16xf32>
    %124 = arith.subf %120, %123 : vector<16x16xf32>
    %125 = math.exp %124 : vector<16x16xf32>
    %cst_79 = arith.constant dense<0.000000e+00> : vector<16xf32>
    %126 = vector.multi_reduction <add>, %125, %cst_79 [1] : vector<16x16xf32> to vector<16xf32>
    %127 = vector.shape_cast %126 : vector<16xf32> to vector<16x1xf32>
    %cst_80 = arith.constant 1.000000e+00 : f32
    %128 = vector.broadcast %cst_80 : f32 to vector<16x1xf32>
    %129 = arith.divf %128, %127 : vector<16x1xf32>
    %130 = vector.broadcast %129 : vector<16x1xf32> to vector<16x16xf32>
    %131 = arith.mulf %125, %130 : vector<16x16xf32>
    %cst_81 = arith.constant dense<0.000000e+00> : vector<16x32xf32>
    %132 = tpu.matmul %131, %115, %cst_81 {dimension_numbers = #tpu.dot_dimension_numbers<[1], [0], [0], [1], [0, 0, 1, 1], [], []>} : vector<16x16xf32>, vector<16x32xf32>, vector<16x32xf32> -> vector<16x32xf32>
    %c16_82 = arith.constant 16 : index
    %c32_83 = arith.constant 32 : index
    %133 = vector.load %arg7[%c16_82, %c32_83] : memref<32x128xf32, #tpu.memory_space<vmem>>, vector<16x32xf32>
    tpu.vector_store %arg7[%c16_82, %c32_83], %132 {strides = array<i32>} : memref<32x128xf32, #tpu.memory_space<vmem>>, vector<16x32xf32>,
    %c16_84 = arith.constant 16 : index
    %c64_85 = arith.constant 64 : index
    %134 = vector.load %arg6[%c16_84, %c64_85] : memref<32x384xf32, #tpu.memory_space<vmem>>, vector<16x32xf32>
    %c16_86 = arith.constant 16 : index
    %c192_87 = arith.constant 192 : index
    %135 = vector.load %arg6[%c16_86, %c192_87] : memref<32x384xf32, #tpu.memory_space<vmem>>, vector<16x32xf32>
    %c16_88 = arith.constant 16 : index
    %c320_89 = arith.constant 320 : index
    %136 = vector.load %arg6[%c16_88, %c320_89] : memref<32x384xf32, #tpu.memory_space<vmem>>, vector<16x32xf32>
    %cst_90 = arith.constant dense<0.000000e+00> : vector<16x16xf32>
    %137 = tpu.matmul %134, %135, %cst_90 {dimension_numbers = #tpu.dot_dimension_numbers<[1], [1], [0], [0], [0, 0, 1, 0], [], []>} : vector<16x32xf32>, vector<16x32xf32>, vector<16x16xf32> -> vector<16x16xf32>
    %cst_91 = arith.constant 0.176776692 : f32
    %138 = vector.broadcast %cst_91 : f32 to vector<16x16xf32>
    %139 = arith.mulf %137, %138 : vector<16x16xf32>
    %cst_92 = arith.constant -1.000000e+30 : f32
    %140 = vector.broadcast %cst_92 : f32 to vector<16x16xf32>
    %141 = arith.select %7, %139, %140 : vector<16x16xi1>, vector<16x16xf32>
    %cst_93 = arith.constant dense<0xFF800000> : vector<16xf32>
    %142 = vector.multi_reduction <maximumf>, %141, %cst_93 [1] : vector<16x16xf32> to vector<16xf32>
    %143 = vector.shape_cast %142 : vector<16xf32> to vector<16x1xf32>
    %144 = vector.broadcast %143 : vector<16x1xf32> to vector<16x16xf32>
    %145 = arith.subf %141, %144 : vector<16x16xf32>
    %146 = math.exp %145 : vector<16x16xf32>
    %cst_94 = arith.constant dense<0.000000e+00> : vector<16xf32>
    %147 = vector.multi_reduction <add>, %146, %cst_94 [1] : vector<16x16xf32> to vector<16xf32>
    %148 = vector.shape_cast %147 : vector<16xf32> to vector<16x1xf32>
    %cst_95 = arith.constant 1.000000e+00 : f32
    %149 = vector.broadcast %cst_95 : f32 to vector<16x1xf32>
    %150 = arith.divf %149, %148 : vector<16x1xf32>
    %151 = vector.broadcast %150 : vector<16x1xf32> to vector<16x16xf32>
    %152 = arith.mulf %146, %151 : vector<16x16xf32>
    %cst_96 = arith.constant dense<0.000000e+00> : vector<16x32xf32>
    %153 = tpu.matmul %152, %136, %cst_96 {dimension_numbers = #tpu.dot_dimension_numbers<[1], [0], [0], [1], [0, 0, 1, 1], [], []>} : vector<16x16xf32>, vector<16x32xf32>, vector<16x32xf32> -> vector<16x32xf32>
    %c16_97 = arith.constant 16 : index
    %c64_98 = arith.constant 64 : index
    %154 = vector.load %arg7[%c16_97, %c64_98] : memref<32x128xf32, #tpu.memory_space<vmem>>, vector<16x32xf32>
    tpu.vector_store %arg7[%c16_97, %c64_98], %153 {strides = array<i32>} : memref<32x128xf32, #tpu.memory_space<vmem>>, vector<16x32xf32>,
    %c16_99 = arith.constant 16 : index
    %c96_100 = arith.constant 96 : index
    %155 = vector.load %arg6[%c16_99, %c96_100] : memref<32x384xf32, #tpu.memory_space<vmem>>, vector<16x32xf32>
    %c16_101 = arith.constant 16 : index
    %c224_102 = arith.constant 224 : index
    %156 = vector.load %arg6[%c16_101, %c224_102] : memref<32x384xf32, #tpu.memory_space<vmem>>, vector<16x32xf32>
    %c16_103 = arith.constant 16 : index
    %c352_104 = arith.constant 352 : index
    %157 = vector.load %arg6[%c16_103, %c352_104] : memref<32x384xf32, #tpu.memory_space<vmem>>, vector<16x32xf32>
    %cst_105 = arith.constant dense<0.000000e+00> : vector<16x16xf32>
    %158 = tpu.matmul %155, %156, %cst_105 {dimension_numbers = #tpu.dot_dimension_numbers<[1], [1], [0], [0], [0, 0, 1, 0], [], []>} : vector<16x32xf32>, vector<16x32xf32>, vector<16x16xf32> -> vector<16x16xf32>
    %cst_106 = arith.constant 0.176776692 : f32
    %159 = vector.broadcast %cst_106 : f32 to vector<16x16xf32>
    %160 = arith.mulf %158, %159 : vector<16x16xf32>
    %cst_107 = arith.constant -1.000000e+30 : f32
    %161 = vector.broadcast %cst_107 : f32 to vector<16x16xf32>
    %162 = arith.select %7, %160, %161 : vector<16x16xi1>, vector<16x16xf32>
    %cst_108 = arith.constant dense<0xFF800000> : vector<16xf32>
    %163 = vector.multi_reduction <maximumf>, %162, %cst_108 [1] : vector<16x16xf32> to vector<16xf32>
    %164 = vector.shape_cast %163 : vector<16xf32> to vector<16x1xf32>
    %165 = vector.broadcast %164 : vector<16x1xf32> to vector<16x16xf32>
    %166 = arith.subf %162, %165 : vector<16x16xf32>
    %167 = math.exp %166 : vector<16x16xf32>
    %cst_109 = arith.constant dense<0.000000e+00> : vector<16xf32>
    %168 = vector.multi_reduction <add>, %167, %cst_109 [1] : vector<16x16xf32> to vector<16xf32>
    %169 = vector.shape_cast %168 : vector<16xf32> to vector<16x1xf32>
    %cst_110 = arith.constant 1.000000e+00 : f32
    %170 = vector.broadcast %cst_110 : f32 to vector<16x1xf32>
    %171 = arith.divf %170, %169 : vector<16x1xf32>
    %172 = vector.broadcast %171 : vector<16x1xf32> to vector<16x16xf32>
    %173 = arith.mulf %167, %172 : vector<16x16xf32>
    %cst_111 = arith.constant dense<0.000000e+00> : vector<16x32xf32>
    %174 = tpu.matmul %173, %157, %cst_111 {dimension_numbers = #tpu.dot_dimension_numbers<[1], [0], [0], [1], [0, 0, 1, 1], [], []>} : vector<16x16xf32>, vector<16x32xf32>, vector<16x32xf32> -> vector<16x32xf32>
    %c16_112 = arith.constant 16 : index
    %c96_113 = arith.constant 96 : index
    %175 = vector.load %arg7[%c16_112, %c96_113] : memref<32x128xf32, #tpu.memory_space<vmem>>, vector<16x32xf32>
    tpu.vector_store %arg7[%c16_112, %c96_113], %174 {strides = array<i32>} : memref<32x128xf32, #tpu.memory_space<vmem>>, vector<16x32xf32>,
    %c0_114 = arith.constant 0 : index
    %c0_115 = arith.constant 0 : index
    %176 = vector.load %arg7[%c0_114, %c0_115] : memref<32x128xf32, #tpu.memory_space<vmem>>, vector<32x128xf32>
    %c0_116 = arith.constant 0 : index
    %c0_117 = arith.constant 0 : index
    %177 = vector.load %arg3[%c0_116, %c0_117] : memref<128x128xf32, #tpu.memory_space<vmem>>, vector<128x128xf32>
    %cst_118 = arith.constant dense<0.000000e+00> : vector<32x128xf32>
    %178 = tpu.matmul %176, %177, %cst_118 {dimension_numbers = #tpu.dot_dimension_numbers<[1], [0], [0], [1], [0, 0, 1, 1], [], []>} : vector<32x128xf32>, vector<128x128xf32>, vector<32x128xf32> -> vector<32x128xf32>
    %c0_119 = arith.constant 0 : index
    %c0_120 = arith.constant 0 : index
    %179 = vector.load %arg4[%c0_119, %c0_120] : memref<1x128xf32, #tpu.memory_space<vmem>>, vector<1x128xf32>
    %180 = vector.broadcast %179 : vector<1x128xf32> to vector<32x128xf32>
    %181 = arith.addf %178, %180 : vector<32x128xf32>
    %182 = vector.shape_cast %181 : vector<32x128xf32> to vector<2x16x128xf32>
    %c0_121 = arith.constant 0 : index
    %c0_122 = arith.constant 0 : index
    %c0_123 = arith.constant 0 : index
    %183 = vector.load %arg5[%c0_121, %c0_122, %c0_123] : memref<2x16x128xf32, #tpu.memory_space<vmem>>, vector<2x16x128xf32>
    tpu.vector_store %arg5[%c0_121, %c0_122, %c0_123], %182 {strides = array<i32>} : memref<2x16x128xf32, #tpu.memory_space<vmem>>, vector<2x16x128xf32>,
    return
  }
  func.func @transform_0(%arg0: i32) -> (i32, i32, i32) {
    %c0_i32 = arith.constant 0 : i32
    %c0_i32_0 = arith.constant 0 : i32
    %c0_i32_1 = arith.constant 0 : i32
    return %arg0, %c0_i32, %c0_i32_0 : i32, i32, i32
  }
  func.func @transform_1(%arg0: i32) -> (i32, i32) {
    %c0_i32 = arith.constant 0 : i32
    %c0_i32_0 = arith.constant 0 : i32
    %c0_i32_1 = arith.constant 0 : i32
    return %c0_i32, %c0_i32_0 : i32, i32
  }
  func.func @transform_2(%arg0: i32) -> (i32, i32) {
    %c0_i32 = arith.constant 0 : i32
    %c0_i32_0 = arith.constant 0 : i32
    %c0_i32_1 = arith.constant 0 : i32
    return %c0_i32, %c0_i32_0 : i32, i32
  }
  func.func @transform_3(%arg0: i32) -> (i32, i32) {
    %c0_i32 = arith.constant 0 : i32
    %c0_i32_0 = arith.constant 0 : i32
    %c0_i32_1 = arith.constant 0 : i32
    return %c0_i32, %c0_i32_0 : i32, i32
  }
  func.func @transform_4(%arg0: i32) -> (i32, i32, i32) {
    %c0_i32 = arith.constant 0 : i32
    %c0_i32_0 = arith.constant 0 : i32
    %c0_i32_1 = arith.constant 0 : i32
    return %arg0, %c0_i32, %c0_i32_0 : i32, i32, i32
  }
}

</mosaic_0001>

<llo_original>
// kernel: multi_head_attention.1
$region0: #{multi_head_attention.1}
  #allocation0 [shape = 'u32[]', space=smem, size = 0x4, offset = 0x4, fixed_abs, tag = 'smem constant byte address 0x4 - core index']
  #allocation1 [shape = 'u32[72,128]{1,0:T(1,128)}', space=vmem, size = 0x9000, scoped, tag = 'internal scratch']
  #allocation2 [shape = 'f32[32,384]{1,0:T(8,128)}', space=vmem, size = 0xc000, scoped, tag = 'scratch operand']
  #allocation3 [shape = 'f32[32,128]{1,0:T(8,128)}', space=vmem, size = 0x4000, scoped, tag = 'scratch operand']
  %s0 = inlined_call_operand.hbm [shape: f32[4,16,128], index: 0, kind: input, shape index: {}]
  %s1 = inlined_call_operand.hbm [shape: f32[128,384], index: 1, kind: input, shape index: {}]
  %s2 = inlined_call_operand.hbm [shape: f32[128,128], index: 2, kind: input, shape index: {}]
  %s3 = inlined_call_operand.vmem [shape: f32[1,128], index: 3, kind: input, shape index: {}]
  %s4 = inlined_call_operand.hbm [shape: f32[4,16,128], index: 4, kind: output, shape index: {}]
  %s5 = sld [smem:[#allocation0]]
  $region61: #{multi_head_attention.1} parent=0
    _
  %s7 = ssub.s32 1, %s5
  %s8 = scalar_select 0, %s7, %s5
  $region1: #{multi_head_attention.1} parent=0
    #allocation4 [shape = 'u8[32768]{0}', space=vmem, size = 0x8000, scoped, tag = 'input window, operand 0']
    #allocation5 [shape = 's32[2]{0}', space=sflag, size = 0x8, scoped, tag = 'scoped memory for multi_head_attention.1']
    #allocation6 [shape = 's32[2]{0}', space=sflag, size = 0x8, scoped, tag = 'scoped memory for multi_head_attention.1']
    #allocation7 [shape = 'u8[196608]{0}', space=vmem, size = 0x30000, scoped, tag = 'input window, operand 1, single buffered']
    #allocation8 [shape = 's32[1]{0}', space=sflag, size = 0x4, scoped, tag = 'scoped memory for multi_head_attention.1']
    #allocation9 [shape = 'u8[65536]{0}', space=vmem, size = 0x10000, scoped, tag = 'input window, operand 2, single buffered']
    #allocation10 [shape = 'u8[32768]{0}', space=vmem, size = 0x8000, scoped, tag = 'output window, operand 0']
    %9 = vsyncpa [#allocation5], 0
    %s10 = scalar_lea.sflag [#allocation5], 1
    %11 = vsyncpa %s10, 0
    %12 = vsyncpa [#allocation8], 0
    %13 = vsyncpa [#allocation6], 0
    %s14 = scalar_lea.sflag [#allocation6], 1
    %15 = vsyncpa %s14, 0
    loop: start=0, step=1, limit=4
    $region2: #{multi_head_attention.1} parent=1 // loop_pre_header
      _
    $region3: #{multi_head_attention.1} parent=1 // loop_header
      %s17 = sphi 0, %s21
      %p18 = scmp.ge.s32.totalorder %s17, 4
      %s27 = sphi 0, %s29
      %s30 = sphi 0, %s27
      %s31 = sphi 0, %s30
      %s47 = sphi 0, %s31
      %s51 = sphi 0, %s51
      %s53 = sphi 0, %s51
      %s54 = sphi 0, %s53
      %s68 = sphi 0, %s54
      %s72 = sphi 0, %s72
      %s74 = sphi 0, %s72
      %s75 = sphi 0, %s74
      %s89 = sphi 0, %s75
      %s93 = sphi 0, %s93
      %s95 = sphi 0, %s93
      %s96 = sphi 0, %s95
      %s110 = sphi 0, %s96
      %s116 = sphi 0, %s118
      %s119 = sphi 0, %s116
      %s120 = sphi 0, %s119
      %s136 = sphi 0, %s120
    $region4: #{multi_head_attention.1} parent=1 // loop_header_branch
      %20 = sbr.rel (%p18) target = $region8
    $region5: #{multi_head_attention.1} parent=1 // loop_body
      %s22 = ssub.s32 %s17, 1
      %s23 = ssub.s32 %s17, 2
      %s24 = sadd.s32 %s17, 1
      %s25 = ssub.s32 %s17, %s24
      %p26 = scmp.eq.s32.totalorder %s25, 0
      %s28 = sadd.s32 %s27, 1
      %s29 = scalar_select %p26, %s27, %s28
      %p32 = pneg %p26
      %p33 = scmp.eq.s32.totalorder %s17, 1
      %p34 = por %p32, %p33
      %p35 = scmp.ne.s32.totalorder %s27, %s30
      %p36 = scmp.eq.s32.totalorder %s17, 0
      %p37 = por %p35, %p36
      %p38 = scmp.ne.s32.totalorder %s27, %s30
      %p39 = scmp.eq.s32.totalorder %s22, 1
      %p40 = por %p38, %p39
      %p41 = scmp.ne.s32.totalorder %s30, %s31
      %p42 = scmp.eq.s32.totalorder %s22, 0
      %p43 = por %p41, %p42
      %p44 = scmp.ne.s32.totalorder %s30, %s31
      %p45 = scmp.eq.s32.totalorder %s23, 1
      %p46 = por %p44, %p45
      %p48 = scmp.ne.s32.totalorder %s31, %s47
      %p49 = scmp.eq.s32.totalorder %s23, 0
      %p50 = por %p48, %p49
      %s52 = sadd.s32 %s51, 1
      %p55 = scmp.eq.s32.totalorder %s17, 1
      %p56 = scmp.ne.s32.totalorder %s51, %s53
      %p57 = scmp.eq.s32.totalorder %s17, 0
      %p58 = por %p56, %p57
      %p59 = scmp.ne.s32.totalorder %s51, %s53
      %p60 = scmp.eq.s32.totalorder %s22, 1
      %p61 = por %p59, %p60
      %p62 = scmp.ne.s32.totalorder %s53, %s54
      %p63 = scmp.eq.s32.totalorder %s22, 0
      %p64 = por %p62, %p63
      %p65 = scmp.ne.s32.totalorder %s53, %s54
      %p66 = scmp.eq.s32.totalorder %s23, 1
      %p67 = por %p65, %p66
      %p69 = scmp.ne.s32.totalorder %s54, %s68
      %p70 = scmp.eq.s32.totalorder %s23, 0
      %p71 = por %p69, %p70
      %s73 = sadd.s32 %s72, 1
      %p76 = scmp.eq.s32.totalorder %s17, 1
      %p77 = scmp.ne.s32.totalorder %s72, %s74
      %p78 = scmp.eq.s32.totalorder %s17, 0
      %p79 = por %p77, %p78
      %p80 = scmp.ne.s32.totalorder %s72, %s74
      %p81 = scmp.eq.s32.totalorder %s22, 1
      %p82 = por %p80, %p81
      %p83 = scmp.ne.s32.totalorder %s74, %s75
      %p84 = scmp.eq.s32.totalorder %s22, 0
      %p85 = por %p83, %p84
      %p86 = scmp.ne.s32.totalorder %s74, %s75
      %p87 = scmp.eq.s32.totalorder %s23, 1
      %p88 = por %p86, %p87
      %p90 = scmp.ne.s32.totalorder %s75, %s89
      %p91 = scmp.eq.s32.totalorder %s23, 0
      %p92 = por %p90, %p91
      %s94 = sadd.s32 %s93, 1
      %p97 = scmp.eq.s32.totalorder %s17, 1
      %p98 = scmp.ne.s32.totalorder %s93, %s95
      %p99 = scmp.eq.s32.totalorder %s17, 0
      %p100 = por %p98, %p99
      %p101 = scmp.ne.s32.totalorder %s93, %s95
      %p102 = scmp.eq.s32.totalorder %s22, 1
      %p103 = por %p101, %p102
      %p104 = scmp.ne.s32.totalorder %s95, %s96
      %p105 = scmp.eq.s32.totalorder %s22, 0
      %p106 = por %p104, %p105
      %p107 = scmp.ne.s32.totalorder %s95, %s96
      %p108 = scmp.eq.s32.totalorder %s23, 1
      %p109 = por %p107, %p108
      %p111 = scmp.ne.s32.totalorder %s96, %s110
      %p112 = scmp.eq.s32.totalorder %s23, 0
      %p113 = por %p111, %p112
      %s114 = ssub.s32 %s17, %s24
      %p115 = scmp.eq.s32.totalorder %s114, 0
      %s117 = sadd.s32 %s116, 1
      %s118 = scalar_select %p115, %s116, %s117
      %p121 = pneg %p115
      %p122 = scmp.eq.s32.totalorder %s17, 1
      %p123 = por %p121, %p122
      %p124 = scmp.ne.s32.totalorder %s116, %s119
      %p125 = scmp.eq.s32.totalorder %s17, 0
      %p126 = por %p124, %p125
      %p127 = scmp.ne.s32.totalorder %s116, %s119
      %p128 = scmp.eq.s32.totalorder %s22, 1
      %p129 = por %p127, %p128
      %p130 = scmp.ne.s32.totalorder %s119, %s120
      %p131 = scmp.eq.s32.totalorder %s22, 0
      %p132 = por %p130, %p131
      %p133 = scmp.ne.s32.totalorder %s119, %s120
      %p134 = scmp.eq.s32.totalorder %s23, 1
      %p135 = por %p133, %p134
      %p137 = scmp.ne.s32.totalorder %s120, %s136
      %p138 = scmp.eq.s32.totalorder %s23, 0
      %p139 = por %p137, %p138
      %p140 = scmp.le.s32.totalorder 1, %s17
      %p141 = scmp.lt.s32.totalorder %s17, 3
      %p142 = pnand %p140, %p141
      %p143 = pneg %p142
      // Predicated region
      $region9: #{multi_head_attention.1} parent=5 // pred_check
        _
      $region10: #{multi_head_attention.1} parent=5 // pred_check_branch
        %145 = sbr.rel (%p142) target = $region12
      $region11: #{multi_head_attention.1} parent=5 // pred_region
        %s146 = ssub.s32 %s17, 1
        // Predicated region
        $region13: #{multi_head_attention.1} parent=11 // pred_check
          %p147 = pneg %p64
        $region14: #{multi_head_attention.1} parent=11 // pred_check_branch
          %149 = sbr.rel (%p147) target = $region16
        $region15: #{multi_head_attention.1} parent=11 // pred_region
          %151 = vsyncadd [#allocation8], 0
          %s152 = sshll.u32 %s1, 4
          %s153 = int_to_ptr.hbm [resolvable:$true] %s152
          %s154 = sshll.u32 [#allocation7], 4
          %s155 = int_to_ptr.vmem [resolvable:$true] %s154
          %160 = dma.hbm_to_vmem [thread:$0]  %s153, 6144, %s155, [#allocation8], 384, 384, 24
        $region16: #{multi_head_attention.1} parent=11 // pred_fallthru
          _
        // Predicated region
        $region17: #{multi_head_attention.1} parent=11 // pred_check
          %p161 = pneg %p85
        $region18: #{multi_head_attention.1} parent=11 // pred_check_branch
          %163 = sbr.rel (%p161) target = $region20
        $region19: #{multi_head_attention.1} parent=11 // pred_region
          %165 = vsyncadd [#allocation8], 0
          %s166 = sshll.u32 %s2, 4
          %s167 = int_to_ptr.hbm [resolvable:$true] %s166
          %s168 = sshll.u32 [#allocation9], 4
          %s169 = int_to_ptr.vmem [resolvable:$true] %s168
          %174 = dma.hbm_to_vmem [thread:$0]  %s167, 2048, %s169, [#allocation8], 128, 128, 8
        $region20: #{multi_head_attention.1} parent=11 // pred_fallthru
          _
        // Predicated region
        $region21: #{multi_head_attention.1} parent=11 // pred_check
          %p175 = pneg %p106
        $region22: #{multi_head_attention.1} parent=11 // pred_check_branch
          %177 = sbr.rel (%p175) target = $region24
        $region23: #{multi_head_attention.1} parent=11 // pred_region
          _
        $region24: #{multi_head_attention.1} parent=11 // pred_fallthru
          _
      $region12: #{multi_head_attention.1} parent=5 // pred_fallthru
        _
      %p178 = scmp.lt.s32.totalorder %s17, 2
      // Predicated region
      $region25: #{multi_head_attention.1} parent=5 // pred_check
        %p179 = pneg %p178
      $region26: #{multi_head_attention.1} parent=5 // pred_check_branch
        %181 = sbr.rel (%p179) target = $region28
      $region27: #{multi_head_attention.1} parent=5 // pred_region
        // Predicated region
        $region29: #{multi_head_attention.1} parent=27 // pred_check
          %p182 = pneg %p37
        $region30: #{multi_head_attention.1} parent=27 // pred_check_branch
          %184 = sbr.rel (%p182) target = $region32
        $region31: #{multi_head_attention.1} parent=27 // pred_region
          %s185 = sand.u32 %s27, 1
          %s186 = scalar_lea.sflag [#allocation5], %s185
          %s187 = sand.u32 %s27, 1
          %s188 = smul.addr %s187, 32
          %s189 = scalar_lea.vmem [#allocation4], %s188
          %s190 = smul.u32 2, %s17
          %192 = vsyncadd %s186, 0
          %s193 = smul.addr %s190, 2
          %s194 = smul.addr %s193, 8
          %s195 = scalar_lea.hbm %s0, %s194
          %s196 = sshll.u32 %s195, 4
          %s197 = int_to_ptr.hbm [resolvable:$true] %s196
          %s198 = sshll.u32 %s189, 4
          %s199 = int_to_ptr.vmem [resolvable:$true] %s198
          %204 = dma.hbm_to_vmem [thread:$0]  %s197, 512, %s199, %s186, 128, 128, 8
        $region32: #{multi_head_attention.1} parent=27 // pred_fallthru
          _
      $region28: #{multi_head_attention.1} parent=5 // pred_fallthru
        _
      %p205 = scmp.le.s32.totalorder 1, %s17
      %p206 = scmp.lt.s32.totalorder %s17, 3
      %p207 = pnand %p205, %p206
      %p208 = pneg %p207
      // Predicated region
      $region33: #{multi_head_attention.1} parent=5 // pred_check
        _
      $region34: #{multi_head_attention.1} parent=5 // pred_check_branch
        %210 = sbr.rel (%p207) target = $region36
      $region35: #{multi_head_attention.1} parent=5 // pred_region
        %s211 = ssub.s32 %s17, 1
        %s212 = sand.u32 %s30, 1
        %s213 = scalar_lea.sflag [#allocation5], %s212
        %s214 = sand.u32 %s30, 1
        %s215 = smul.addr %s214, 32
        %s216 = scalar_lea.vmem [#allocation4], %s215
        // Predicated region
        $region37: #{multi_head_attention.1} parent=35 // pred_check
          %p217 = pneg %p43
        $region38: #{multi_head_attention.1} parent=35 // pred_check_branch
          %219 = sbr.rel (%p217) target = $region40
        $region39: #{multi_head_attention.1} parent=35 // pred_region
          %221 = dma.done %s213, 512
        $region40: #{multi_head_attention.1} parent=35 // pred_fallthru
          _
        // Predicated region
        $region41: #{multi_head_attention.1} parent=35 // pred_check
          %p222 = pneg %p64
        $region42: #{multi_head_attention.1} parent=35 // pred_check_branch
          %224 = sbr.rel (%p222) target = $region44
        $region43: #{multi_head_attention.1} parent=35 // pred_region
          %226 = dma.done [#allocation8], 6144
        $region44: #{multi_head_attention.1} parent=35 // pred_fallthru
          _
        // Predicated region
        $region45: #{multi_head_attention.1} parent=35 // pred_check
          %p227 = pneg %p85
        $region46: #{multi_head_attention.1} parent=35 // pred_check_branch
          %229 = sbr.rel (%p227) target = $region48
        $region47: #{multi_head_attention.1} parent=35 // pred_region
          %231 = dma.done [#allocation8], 2048
        $region48: #{multi_head_attention.1} parent=35 // pred_fallthru
          _
        %s232 = sand.u32 %s30, 1
        %s233 = scalar_lea.sflag [#allocation5], %s232
        %s234 = sand.u32 %s30, 1
        %s235 = smul.addr %s234, 32
        %s236 = scalar_lea.vmem [#allocation4], %s235
        %p237 = pneg %p43
        %p238 = pneg %p40
        %p239 = pneg %p64
        %p240 = pneg %p61
        %p241 = pneg %p85
        %p242 = pneg %p82
        %p243 = pneg %p106
        %p244 = pneg %p103
        %p245 = pneg %p132
        %p246 = pneg %p129
        %s247 = sand.u32 %s119, 1
        %s248 = scalar_lea.sflag [#allocation6], %s247
        %s249 = sand.u32 %s119, 1
        %s250 = smul.addr %s249, 32
        %s251 = scalar_lea.vmem [#allocation10], %s250
        %s252 = smul.u32 2, %s22
        %s253 = smul.u32 2, %s22
        %v254 = vld [vmem:[%s216] sm:$0xff]
        %v255 = vld [vmem:[%s216 + $0x8] sm:$0xff]
        %v256 = vld [vmem:[%s216 + $0x10] sm:$0xff]
        %v257 = vld [vmem:[%s216 + $0x18] sm:$0xff]
        %v258 = vld [vmem:[#allocation7] sm:$0xff]
        %v259 = vld [vmem:[#allocation7 + $0x8] sm:$0xff]
        %v260 = vld [vmem:[#allocation7 + $0x10] sm:$0xff]
        %v261 = vld [vmem:[#allocation7 + $0x18] sm:$0xff]
        %v262 = vld [vmem:[#allocation7 + $0x20] sm:$0xff]
        %v263 = vld [vmem:[#allocation7 + $0x28] sm:$0xff]
        %v264 = vld [vmem:[#allocation7 + $0x30] sm:$0xff]
        %v265 = vld [vmem:[#allocation7 + $0x38] sm:$0xff]
        %v266 = vld [vmem:[#allocation7 + $0x40] sm:$0xff]
        %v267 = vld [vmem:[#allocation7 + $0x48] sm:$0xff]
        %v268 = vld [vmem:[#allocation7 + $0x50] sm:$0xff]
        %v269 = vld [vmem:[#allocation7 + $0x58] sm:$0xff]
        %v270 = vld [vmem:[#allocation7 + $0x60] sm:$0xff]
        %v271 = vld [vmem:[#allocation7 + $0x68] sm:$0xff]
        %v272 = vld [vmem:[#allocation7 + $0x70] sm:$0xff]
        %v273 = vld [vmem:[#allocation7 + $0x78] sm:$0xff]
        %v274 = vld [vmem:[#allocation7 + $0x80] sm:$0xff]
        %v275 = vld [vmem:[#allocation7 + $0x88] sm:$0xff]
        %v276 = vld [vmem:[#allocation7 + $0x90] sm:$0xff]
        %v277 = vld [vmem:[#allocation7 + $0x98] sm:$0xff]
        %v278 = vld [vmem:[#allocation7 + $0xa0] sm:$0xff]
        %v279 = vld [vmem:[#allocation7 + $0xa8] sm:$0xff]
        %v280 = vld [vmem:[#allocation7 + $0xb0] sm:$0xff]
        %v281 = vld [vmem:[#allocation7 + $0xb8] sm:$0xff]
        %v282 = vld [vmem:[#allocation7 + $0xc0] sm:$0xff]
        %v283 = vld [vmem:[#allocation7 + $0xc8] sm:$0xff]
        %v284 = vld [vmem:[#allocation7 + $0xd0] sm:$0xff]
        %v285 = vld [vmem:[#allocation7 + $0xd8] sm:$0xff]
        %v286 = vld [vmem:[#allocation7 + $0xe0] sm:$0xff]
        %v287 = vld [vmem:[#allocation7 + $0xe8] sm:$0xff]
        %v288 = vld [vmem:[#allocation7 + $0xf0] sm:$0xff]
        %v289 = vld [vmem:[#allocation7 + $0xf8] sm:$0xff]
        %v290 = vld [vmem:[#allocation7 + $0x100] sm:$0xff]
        %v291 = vld [vmem:[#allocation7 + $0x108] sm:$0xff]
        %v292 = vld [vmem:[#allocation7 + $0x110] sm:$0xff]
        %v293 = vld [vmem:[#allocation7 + $0x118] sm:$0xff]
        %v294 = vld [vmem:[#allocation7 + $0x120] sm:$0xff]
        %v295 = vld [vmem:[#allocation7 + $0x128] sm:$0xff]
        %v296 = vld [vmem:[#allocation7 + $0x130] sm:$0xff]
        %v297 = vld [vmem:[#allocation7 + $0x138] sm:$0xff]
        %v298 = vld [vmem:[#allocation7 + $0x140] sm:$0xff]
        %v299 = vld [vmem:[#allocation7 + $0x148] sm:$0xff]
        %v300 = vld [vmem:[#allocation7 + $0x150] sm:$0xff]
        %v301 = vld [vmem:[#allocation7 + $0x158] sm:$0xff]
        %v302 = vld [vmem:[#allocation7 + $0x160] sm:$0xff]
        %v303 = vld [vmem:[#allocation7 + $0x168] sm:$0xff]
        %v304 = vld [vmem:[#allocation7 + $0x170] sm:$0xff]
        %v305 = vld [vmem:[#allocation7 + $0x178] sm:$0xff]
        %306 = vmatpush.msra.mxu0 %v303
        %307 = vmatpush.msra.mxu0 %v300
        %308 = vmatpush.msra.mxu0 %v297
        %309 = vmatpush.msra.mxu0 %v294
        %310 = vmatpush.msra.mxu0 %v291
        %311 = vmatpush.msra.mxu0 %v288
        %312 = vmatpush.msra.mxu0 %v285
        %313 = vmatpush.msra.mxu0 %v282
        %314 = vmatpush.msra.mxu0 %v279
        %315 = vmatpush.msra.mxu0 %v276
        %316 = vmatpush.msra.mxu0 %v273
        %317 = vmatpush.msra.mxu0 %v270
        %318 = vmatpush.msra.mxu0 %v267
        %319 = vmatpush.msra.mxu0 %v264
        %320 = vmatpush.msra.mxu0 %v261
        %321 = vmatpush.msra.mxu0 %v258
        %322 = vmatmul.f32.gmra.mxu0 %v254
        %v323 = vpop.f32.mrf.mxu0
        %v324 = vadd.f32 0.0, %v323
        %325 = vmatmul.f32.gmra.mxu0 %v255
        %v326 = vpop.f32.mrf.mxu0
        %v327 = vadd.f32 0.0, %v326
        %328 = vmatmul.f32.gmra.mxu0 %v256
        %v329 = vpop.f32.mrf.mxu0
        %v330 = vadd.f32 0.0, %v329
        %331 = vmatmul.f32.gmra.mxu0 %v257
        %v332 = vpop.f32.mrf.mxu0
        %v333 = vadd.f32 0.0, %v332
        %334 = vdwg.mxu0
        %335 = vmatpush.msra.mxu0 %v304
        %336 = vmatpush.msra.mxu0 %v301
        %337 = vmatpush.msra.mxu0 %v298
        %338 = vmatpush.msra.mxu0 %v295
        %339 = vmatpush.msra.mxu0 %v292
        %340 = vmatpush.msra.mxu0 %v289
        %341 = vmatpush.msra.mxu0 %v286
        %342 = vmatpush.msra.mxu0 %v283
        %343 = vmatpush.msra.mxu0 %v280
        %344 = vmatpush.msra.mxu0 %v277
        %345 = vmatpush.msra.mxu0 %v274
        %346 = vmatpush.msra.mxu0 %v271
        %347 = vmatpush.msra.mxu0 %v268
        %348 = vmatpush.msra.mxu0 %v265
        %349 = vmatpush.msra.mxu0 %v262
        %350 = vmatpush.msra.mxu0 %v259
        %351 = vmatmul.f32.gmra.mxu0 %v254
        %v352 = vpop.f32.mrf.mxu0
        %v353 = vadd.f32 0.0, %v352
        %354 = vmatmul.f32.gmra.mxu0 %v255
        %v355 = vpop.f32.mrf.mxu0
        %v356 = vadd.f32 0.0, %v355
        %357 = vmatmul.f32.gmra.mxu0 %v256
        %v358 = vpop.f32.mrf.mxu0
        %v359 = vadd.f32 0.0, %v358
        %360 = vmatmul.f32.gmra.mxu0 %v257
        %v361 = vpop.f32.mrf.mxu0
        %v362 = vadd.f32 0.0, %v361
        %363 = vdwg.mxu0
        %364 = vmatpush.msra.mxu0 %v305
        %365 = vmatpush.msra.mxu0 %v302
        %366 = vmatpush.msra.mxu0 %v299
        %367 = vmatpush.msra.mxu0 %v296
        %368 = vmatpush.msra.mxu0 %v293
        %369 = vmatpush.msra.mxu0 %v290
        %370 = vmatpush.msra.mxu0 %v287
        %371 = vmatpush.msra.mxu0 %v284
        %372 = vmatpush.msra.mxu0 %v281
        %373 = vmatpush.msra.mxu0 %v278
        %374 = vmatpush.msra.mxu0 %v275
        %375 = vmatpush.msra.mxu0 %v272
        %376 = vmatpush.msra.mxu0 %v269
        %377 = vmatpush.msra.mxu0 %v266
        %378 = vmatpush.msra.mxu0 %v263
        %379 = vmatpush.msra.mxu0 %v260
        %380 = vmatmul.f32.gmra.mxu0 %v254
        %v381 = vpop.f32.mrf.mxu0
        %v382 = vadd.f32 0.0, %v381
        %383 = vmatmul.f32.gmra.mxu0 %v255
        %v384 = vpop.f32.mrf.mxu0
        %v385 = vadd.f32 0.0, %v384
        %386 = vmatmul.f32.gmra.mxu0 %v256
        %v387 = vpop.f32.mrf.mxu0
        %v388 = vadd.f32 0.0, %v387
        %389 = vmatmul.f32.gmra.mxu0 %v257
        %v390 = vpop.f32.mrf.mxu0
        %v391 = vadd.f32 0.0, %v390
        %392 = vdwg.mxu0
        %393 = vst [vmem:[#allocation2] sm:$0xff] %v324
        %394 = vst [vmem:[#allocation2 + $0x8] sm:$0xff] %v353
        %395 = vst [vmem:[#allocation2 + $0x10] sm:$0xff] %v382
        %396 = vst [vmem:[#allocation2 + $0x18] sm:$0xff] %v327
        %397 = vst [vmem:[#allocation2 + $0x20] sm:$0xff] %v356
        %398 = vst [vmem:[#allocation2 + $0x28] sm:$0xff] %v385
        %399 = vst [vmem:[#allocation2 + $0x30] sm:$0xff] %v330
        %400 = vst [vmem:[#allocation2 + $0x38] sm:$0xff] %v359
        %401 = vst [vmem:[#allocation2 + $0x40] sm:$0xff] %v388
        %402 = vst [vmem:[#allocation2 + $0x48] sm:$0xff] %v333
        %403 = vst [vmem:[#allocation2 + $0x50] sm:$0xff] %v362
        %404 = vst [vmem:[#allocation2 + $0x58] sm:$0xff] %v391
        %v405 = vlaneseq
        %v406 = vshrl.u32 %v405, 7
        %v407 = vadd.s32 %v406, 8
        %v408 = vlaneseq
        %v409 = vand.u32 %v408, 127
        %vm410 = vcmp.ge.s32.totalorder %v406, %v409
        %vm411 = vcmp.ge.s32.totalorder %v407, %v409
        %v412 = vld [vmem:[#allocation2] sm:$0xff]
        %v413 = vld [vmem:[#allocation2 + $0x18] sm:$0xff]
        %v414 = vld [vmem:[#allocation2 + $0x8] sm:$0xff]
        %v415 = vld [vmem:[#allocation2 + $0x20] sm:$0xff]
        %v416 = vld [vmem:[#allocation2 + $0x10] sm:$0xff]
        %v417 = vld [vmem:[#allocation2 + $0x28] sm:$0xff]
        %vm418 = vcmask 261120
        %v420 = vsel %vm418, %v412, 0
        %v423 = vsel %vm418, %v413, 0
        %v426 = vsel %vm418, %v414, 0
        %v429 = vsel %vm418, %v415, 0
        %431 = vmatpush.xpose.msra.mxu0 0.0
        %432 = vmatpush.xpose.msra.mxu0 0.0
        %433 = vmatpush.xpose.msra.mxu0 0.0
        %434 = vmatpush.xpose.msra.mxu0 0.0
        %435 = vmatpush.xpose.msra.mxu0 0.0
        %436 = vmatpush.xpose.msra.mxu0 0.0
        %437 = vmatpush.xpose.msra.mxu0 0.0
        %438 = vmatpush.xpose.msra.mxu0 0.0
        %439 = vmatpush.xpose.msra.mxu0 0.0
        %440 = vmatpush.xpose.msra.mxu0 0.0
        %441 = vmatpush.xpose.msra.mxu0 0.0
        %442 = vmatpush.xpose.msra.mxu0 0.0
        %443 = vmatpush.xpose.msra.mxu0 0.0
        %444 = vmatpush.xpose.msra.mxu0 0.0
        %445 = vmatpush.xpose.msra.mxu0 %v429
        %446 = vmatpush.xpose.msra.mxu0 %v426
        %447 = vmatmul.f32.gmra.mxu0 %v420
        %v448 = vpop.f32.mrf.mxu0
        %v449 = vadd.f32 0.0, %v448
        %450 = vmatmul.f32.gmra.mxu0 %v423
        %v451 = vpop.f32.mrf.mxu0
        %v452 = vadd.f32 0.0, %v451
        %453 = vdwg.mxu0
        %v454 = vmul.f32 %v449, 0.17677669
        %v455 = vmul.f32 %v452, 0.17677669
        %v456 = vsel %vm410, %v454, -1e+30
        %v457 = vsel %vm411, %v455, -1e+30
        %vm458 = vcmask 130048
        %v459 = vsel %vm458, %v456, -inf
        %460 = vmax.xlane.f32.xlu0 %v459
        %v461 = vpop.xlane.xlu0 %460
        %v462 = vsel %vm458, %v457, -inf
        %463 = vmax.xlane.f32.xlu0 %v462
        %v464 = vpop.xlane.xlu0 %463
        %v465 = vsub.f32 %v456, %v461
        %v466 = vsub.f32 %v457, %v464
        %v467 = vmul.f32 %v465, 1.442695
        %v468 = vpow.pop %v467
        %v469 = vmul.f32 %v466, 1.442695
        %v470 = vpow.pop %v469
        %v471 = vsel %vm458, %v468, 0.0
        %472 = vadd.xlane.f32.xlu0 %v471
        %v473 = vpop.xlane.xlu0 %472
        %v474 = vsel %vm458, %v470, 0.0
        %475 = vadd.xlane.f32.xlu0 %v474
        %v476 = vpop.xlane.xlu0 %475
        %v477 = vrcp.pop %v473
        %v478 = vmul.f32 %v473, %v477
        %v479 = vsub.f32 1.0, %v478
        %v480 = vmul.f32 %v477, %v479
        %v481 = vadd.f32 %v477, %v480
        %vm482 = vweird.f32 %v473
        %vm483 = vweird.f32 %v477
        %vm484 = vmor %vm482, %vm483
        %v485 = vsel %vm484, %v477, %v481
        %v486 = vand.u32 2147483647, %v473
        %vm487 = vcmp.eq.f32.partialorder %v486, 8.507059e+37
        %v488 = vand.u32 %v473, 2147483648
        %v489 = vor.u32 1.1754944e-38, %v488
        %v490 = vsel %vm487, %v489, %v485
        %v491 = vmul.f32 1.0, %v490
        %v492 = vrcp.pop %v476
        %v493 = vmul.f32 %v476, %v492
        %v494 = vsub.f32 1.0, %v493
        %v495 = vmul.f32 %v492, %v494
        %v496 = vadd.f32 %v492, %v495
        %vm497 = vweird.f32 %v476
        %vm498 = vweird.f32 %v492
        %vm499 = vmor %vm497, %vm498
        %v500 = vsel %vm499, %v492, %v496
        %v501 = vand.u32 2147483647, %v476
        %vm502 = vcmp.eq.f32.partialorder %v501, 8.507059e+37
        %v503 = vand.u32 %v476, 2147483648
        %v504 = vor.u32 1.1754944e-38, %v503
        %v505 = vsel %vm502, %v504, %v500
        %v506 = vmul.f32 1.0, %v505
        %v507 = vmul.f32 %v468, %v491
        %v508 = vmul.f32 %v470, %v506
        %v510 = vsel %vm458, %v507, 0
        %v513 = vsel %vm458, %v508, 0
        %515 = vmatpush.msra.mxu0 0.0
        %516 = vmatpush.msra.mxu0 0.0
        %517 = vmatpush.msra.mxu0 0.0
        %518 = vmatpush.msra.mxu0 0.0
        %519 = vmatpush.msra.mxu0 0.0
        %520 = vmatpush.msra.mxu0 0.0
        %521 = vmatpush.msra.mxu0 0.0
        %522 = vmatpush.msra.mxu0 0.0
        %523 = vmatpush.msra.mxu0 0.0
        %524 = vmatpush.msra.mxu0 0.0
        %525 = vmatpush.msra.mxu0 0.0
        %526 = vmatpush.msra.mxu0 0.0
        %527 = vmatpush.msra.mxu0 0.0
        %528 = vmatpush.msra.mxu0 0.0
        %529 = vmatpush.msra.mxu0 %v417
        %530 = vmatpush.msra.mxu0 %v416
        %531 = vmatmul.f32.gmra.mxu0 %v510
        %v532 = vpop.f32.mrf.mxu0
        %v533 = vadd.f32 0.0, %v532
        %534 = vmatmul.f32.gmra.mxu0 %v513
        %v535 = vpop.f32.mrf.mxu0
        %v536 = vadd.f32 0.0, %v535
        %537 = vdwg.mxu0
        %538 = vst.msk [vmem:[#allocation3] sm:$0xff] %vm418, %v533
        %539 = vst.msk [vmem:[#allocation3 + $0x8] sm:$0xff] %vm418, %v536
        %v540 = vld [vmem:[#allocation2] sm:$0xff]
        %v541 = vld [vmem:[#allocation2 + $0x18] sm:$0xff]
        %v542 = vld [vmem:[#allocation2 + $0x8] sm:$0xff]
        %v543 = vld [vmem:[#allocation2 + $0x20] sm:$0xff]
        %v544 = vld [vmem:[#allocation2 + $0x10] sm:$0xff]
        %v545 = vld [vmem:[#allocation2 + $0x28] sm:$0xff]
        %548 = vrot.lane.b32.xlu0 %v540, 96
        %v549 = vpop.permute.xlu0 %548
        %550 = vrot.lane.b32.xlu0 %v541, 96
        %v551 = vpop.permute.xlu0 %550
        %554 = vrot.lane.b32.xlu0 %v542, 96
        %v555 = vpop.permute.xlu0 %554
        %556 = vrot.lane.b32.xlu0 %v543, 96
        %v557 = vpop.permute.xlu0 %556
        %v558 = vsel %vm418, %v549, 0
        %v560 = vsel %vm418, %v551, 0
        %v562 = vsel %vm418, %v555, 0
        %v564 = vsel %vm418, %v557, 0
        %566 = vmatpush.xpose.msra.mxu0 0.0
        %567 = vmatpush.xpose.msra.mxu0 0.0
        %568 = vmatpush.xpose.msra.mxu0 0.0
        %569 = vmatpush.xpose.msra.mxu0 0.0
        %570 = vmatpush.xpose.msra.mxu0 0.0
        %571 = vmatpush.xpose.msra.mxu0 0.0
        %572 = vmatpush.xpose.msra.mxu0 0.0
        %573 = vmatpush.xpose.msra.mxu0 0.0
        %574 = vmatpush.xpose.msra.mxu0 0.0
        %575 = vmatpush.xpose.msra.mxu0 0.0
        %576 = vmatpush.xpose.msra.mxu0 0.0
        %577 = vmatpush.xpose.msra.mxu0 0.0
        %578 = vmatpush.xpose.msra.mxu0 0.0
        %579 = vmatpush.xpose.msra.mxu0 0.0
        %580 = vmatpush.xpose.msra.mxu0 %v564
        %581 = vmatpush.xpose.msra.mxu0 %v562
        %582 = vmatmul.f32.gmra.mxu0 %v558
        %v583 = vpop.f32.mrf.mxu0
        %v584 = vadd.f32 0.0, %v583
        %585 = vmatmul.f32.gmra.mxu0 %v560
        %v586 = vpop.f32.mrf.mxu0
        %v587 = vadd.f32 0.0, %v586
        %588 = vdwg.mxu0
        %v589 = vmul.f32 %v584, 0.17677669
        %v590 = vmul.f32 %v587, 0.17677669
        %v591 = vsel %vm410, %v589, -1e+30
        %v592 = vsel %vm411, %v590, -1e+30
        %v593 = vsel %vm458, %v591, -inf
        %594 = vmax.xlane.f32.xlu0 %v593
        %v595 = vpop.xlane.xlu0 %594
        %v596 = vsel %vm458, %v592, -inf
        %597 = vmax.xlane.f32.xlu0 %v596
        %v598 = vpop.xlane.xlu0 %597
        %v599 = vsub.f32 %v591, %v595
        %v600 = vsub.f32 %v592, %v598
        %v601 = vmul.f32 %v599, 1.442695
        %v602 = vpow.pop %v601
        %v603 = vmul.f32 %v600, 1.442695
        %v604 = vpow.pop %v603
        %v605 = vsel %vm458, %v602, 0.0
        %606 = vadd.xlane.f32.xlu0 %v605
        %v607 = vpop.xlane.xlu0 %606
        %v608 = vsel %vm458, %v604, 0.0
        %609 = vadd.xlane.f32.xlu0 %v608
        %v610 = vpop.xlane.xlu0 %609
        %v611 = vrcp.pop %v607
        %v612 = vmul.f32 %v607, %v611
        %v613 = vsub.f32 1.0, %v612
        %v614 = vmul.f32 %v611, %v613
        %v615 = vadd.f32 %v611, %v614
        %vm616 = vweird.f32 %v607
        %vm617 = vweird.f32 %v611
        %vm618 = vmor %vm616, %vm617
        %v619 = vsel %vm618, %v611, %v615
        %v620 = vand.u32 2147483647, %v607
        %vm621 = vcmp.eq.f32.partialorder %v620, 8.507059e+37
        %v622 = vand.u32 %v607, 2147483648
        %v623 = vor.u32 1.1754944e-38, %v622
        %v624 = vsel %vm621, %v623, %v619
        %v625 = vmul.f32 1.0, %v624
        %v626 = vrcp.pop %v610
        %v627 = vmul.f32 %v610, %v626
        %v628 = vsub.f32 1.0, %v627
        %v629 = vmul.f32 %v626, %v628
        %v630 = vadd.f32 %v626, %v629
        %vm631 = vweird.f32 %v610
        %vm632 = vweird.f32 %v626
        %vm633 = vmor %vm631, %vm632
        %v634 = vsel %vm633, %v626, %v630
        %v635 = vand.u32 2147483647, %v610
        %vm636 = vcmp.eq.f32.partialorder %v635, 8.507059e+37
        %v637 = vand.u32 %v610, 2147483648
        %v638 = vor.u32 1.1754944e-38, %v637
        %v639 = vsel %vm636, %v638, %v634
        %v640 = vmul.f32 1.0, %v639
        %v641 = vmul.f32 %v602, %v625
        %v642 = vmul.f32 %v604, %v640
        %645 = vrot.lane.b32.xlu0 %v544, 96
        %v646 = vpop.permute.xlu0 %645
        %647 = vrot.lane.b32.xlu0 %v545, 96
        %v648 = vpop.permute.xlu0 %647
        %v652 = vsel %vm458, %v641, 0
        %v655 = vsel %vm458, %v642, 0
        %657 = vmatpush.msra.mxu0 0.0
        %658 = vmatpush.msra.mxu0 0.0
        %659 = vmatpush.msra.mxu0 0.0
        %660 = vmatpush.msra.mxu0 0.0
        %661 = vmatpush.msra.mxu0 0.0
        %662 = vmatpush.msra.mxu0 0.0
        %663 = vmatpush.msra.mxu0 0.0
        %664 = vmatpush.msra.mxu0 0.0
        %665 = vmatpush.msra.mxu0 0.0
        %666 = vmatpush.msra.mxu0 0.0
        %667 = vmatpush.msra.mxu0 0.0
        %668 = vmatpush.msra.mxu0 0.0
        %669 = vmatpush.msra.mxu0 0.0
        %670 = vmatpush.msra.mxu0 0.0
        %671 = vmatpush.msra.mxu0 %v648
        %672 = vmatpush.msra.mxu0 %v646
        %673 = vmatmul.f32.gmra.mxu0 %v652
        %v674 = vpop.f32.mrf.mxu0
        %v675 = vadd.f32 0.0, %v674
        %676 = vmatmul.f32.gmra.mxu0 %v655
        %v677 = vpop.f32.mrf.mxu0
        %v678 = vadd.f32 0.0, %v677
        %679 = vdwg.mxu0
        %682 = vrot.lane.b32.xlu0 %v675, 32
        %v683 = vpop.permute.xlu0 %682
        %684 = vrot.lane.b32.xlu0 %v678, 32
        %v685 = vpop.permute.xlu0 %684
        %vm688 = vcmask 523520
        %689 = vst.msk [vmem:[#allocation3] sm:$0xff] %vm688, %v683
        %690 = vst.msk [vmem:[#allocation3 + $0x8] sm:$0xff] %vm688, %v685
        %v691 = vld [vmem:[#allocation2] sm:$0xff]
        %v692 = vld [vmem:[#allocation2 + $0x18] sm:$0xff]
        %v693 = vld [vmem:[#allocation2 + $0x8] sm:$0xff]
        %v694 = vld [vmem:[#allocation2 + $0x20] sm:$0xff]
        %v695 = vld [vmem:[#allocation2 + $0x10] sm:$0xff]
        %v696 = vld [vmem:[#allocation2 + $0x28] sm:$0xff]
        %699 = vrot.lane.b32.xlu0 %v691, 64
        %v700 = vpop.permute.xlu0 %699
        %701 = vrot.lane.b32.xlu0 %v692, 64
        %v702 = vpop.permute.xlu0 %701
        %705 = vrot.lane.b32.xlu0 %v693, 64
        %v706 = vpop.permute.xlu0 %705
        %707 = vrot.lane.b32.xlu0 %v694, 64
        %v708 = vpop.permute.xlu0 %707
        %v709 = vsel %vm418, %v700, 0
        %v711 = vsel %vm418, %v702, 0
        %v713 = vsel %vm418, %v706, 0
        %v715 = vsel %vm418, %v708, 0
        %717 = vmatpush.xpose.msra.mxu0 0.0
        %718 = vmatpush.xpose.msra.mxu0 0.0
        %719 = vmatpush.xpose.msra.mxu0 0.0
        %720 = vmatpush.xpose.msra.mxu0 0.0
        %721 = vmatpush.xpose.msra.mxu0 0.0
        %722 = vmatpush.xpose.msra.mxu0 0.0
        %723 = vmatpush.xpose.msra.mxu0 0.0
        %724 = vmatpush.xpose.msra.mxu0 0.0
        %725 = vmatpush.xpose.msra.mxu0 0.0
        %726 = vmatpush.xpose.msra.mxu0 0.0
        %727 = vmatpush.xpose.msra.mxu0 0.0
        %728 = vmatpush.xpose.msra.mxu0 0.0
        %729 = vmatpush.xpose.msra.mxu0 0.0
        %730 = vmatpush.xpose.msra.mxu0 0.0
        %731 = vmatpush.xpose.msra.mxu0 %v715
        %732 = vmatpush.xpose.msra.mxu0 %v713
        %733 = vmatmul.f32.gmra.mxu0 %v709
        %v734 = vpop.f32.mrf.mxu0
        %v735 = vadd.f32 0.0, %v734
        %736 = vmatmul.f32.gmra.mxu0 %v711
        %v737 = vpop.f32.mrf.mxu0
        %v738 = vadd.f32 0.0, %v737
        %739 = vdwg.mxu0
        %v740 = vmul.f32 %v735, 0.17677669
        %v741 = vmul.f32 %v738, 0.17677669
        %v742 = vsel %vm410, %v740, -1e+30
        %v743 = vsel %vm411, %v741, -1e+30
        %v744 = vsel %vm458, %v742, -inf
        %745 = vmax.xlane.f32.xlu0 %v744
        %v746 = vpop.xlane.xlu0 %745
        %v747 = vsel %vm458, %v743, -inf
        %748 = vmax.xlane.f32.xlu0 %v747
        %v749 = vpop.xlane.xlu0 %748
        %v750 = vsub.f32 %v742, %v746
        %v751 = vsub.f32 %v743, %v749
        %v752 = vmul.f32 %v750, 1.442695
        %v753 = vpow.pop %v752
        %v754 = vmul.f32 %v751, 1.442695
        %v755 = vpow.pop %v754
        %v756 = vsel %vm458, %v753, 0.0
        %757 = vadd.xlane.f32.xlu0 %v756
        %v758 = vpop.xlane.xlu0 %757
        %v759 = vsel %vm458, %v755, 0.0
        %760 = vadd.xlane.f32.xlu0 %v759
        %v761 = vpop.xlane.xlu0 %760
        %v762 = vrcp.pop %v758
        %v763 = vmul.f32 %v758, %v762
        %v764 = vsub.f32 1.0, %v763
        %v765 = vmul.f32 %v762, %v764
        %v766 = vadd.f32 %v762, %v765
        %vm767 = vweird.f32 %v758
        %vm768 = vweird.f32 %v762
        %vm769 = vmor %vm767, %vm768
        %v770 = vsel %vm769, %v762, %v766
        %v771 = vand.u32 2147483647, %v758
        %vm772 = vcmp.eq.f32.partialorder %v771, 8.507059e+37
        %v773 = vand.u32 %v758, 2147483648
        %v774 = vor.u32 1.1754944e-38, %v773
        %v775 = vsel %vm772, %v774, %v770
        %v776 = vmul.f32 1.0, %v775
        %v777 = vrcp.pop %v761
        %v778 = vmul.f32 %v761, %v777
        %v779 = vsub.f32 1.0, %v778
        %v780 = vmul.f32 %v777, %v779
        %v781 = vadd.f32 %v777, %v780
        %vm782 = vweird.f32 %v761
        %vm783 = vweird.f32 %v777
        %vm784 = vmor %vm782, %vm783
        %v785 = vsel %vm784, %v777, %v781
        %v786 = vand.u32 2147483647, %v761
        %vm787 = vcmp.eq.f32.partialorder %v786, 8.507059e+37
        %v788 = vand.u32 %v761, 2147483648
        %v789 = vor.u32 1.1754944e-38, %v788
        %v790 = vsel %vm787, %v789, %v785
        %v791 = vmul.f32 1.0, %v790
        %v792 = vmul.f32 %v753, %v776
        %v793 = vmul.f32 %v755, %v791
        %796 = vrot.lane.b32.xlu0 %v695, 64
        %v797 = vpop.permute.xlu0 %796
        %798 = vrot.lane.b32.xlu0 %v696, 64
        %v799 = vpop.permute.xlu0 %798
        %v803 = vsel %vm458, %v792, 0
        %v806 = vsel %vm458, %v793, 0
        %808 = vmatpush.msra.mxu0 0.0
        %809 = vmatpush.msra.mxu0 0.0
        %810 = vmatpush.msra.mxu0 0.0
        %811 = vmatpush.msra.mxu0 0.0
        %812 = vmatpush.msra.mxu0 0.0
        %813 = vmatpush.msra.mxu0 0.0
        %814 = vmatpush.msra.mxu0 0.0
        %815 = vmatpush.msra.mxu0 0.0
        %816 = vmatpush.msra.mxu0 0.0
        %817 = vmatpush.msra.mxu0 0.0
        %818 = vmatpush.msra.mxu0 0.0
        %819 = vmatpush.msra.mxu0 0.0
        %820 = vmatpush.msra.mxu0 0.0
        %821 = vmatpush.msra.mxu0 0.0
        %822 = vmatpush.msra.mxu0 %v799
        %823 = vmatpush.msra.mxu0 %v797
        %824 = vmatmul.f32.gmra.mxu0 %v803
        %v825 = vpop.f32.mrf.mxu0
        %v826 = vadd.f32 0.0, %v825
        %827 = vmatmul.f32.gmra.mxu0 %v806
        %v828 = vpop.f32.mrf.mxu0
        %v829 = vadd.f32 0.0, %v828
        %830 = vdwg.mxu0
        %833 = vrot.lane.b32.xlu0 %v826, 64
        %v834 = vpop.permute.xlu0 %833
        %835 = vrot.lane.b32.xlu0 %v829, 64
        %v836 = vpop.permute.xlu0 %835
        %vm839 = vcmask 785920
        %840 = vst.msk [vmem:[#allocation3] sm:$0xff] %vm839, %v834
        %841 = vst.msk [vmem:[#allocation3 + $0x8] sm:$0xff] %vm839, %v836
        %v842 = vld [vmem:[#allocation2] sm:$0xff]
        %v843 = vld [vmem:[#allocation2 + $0x18] sm:$0xff]
        %v844 = vld [vmem:[#allocation2 + $0x8] sm:$0xff]
        %v845 = vld [vmem:[#allocation2 + $0x20] sm:$0xff]
        %v846 = vld [vmem:[#allocation2 + $0x10] sm:$0xff]
        %v847 = vld [vmem:[#allocation2 + $0x28] sm:$0xff]
        %850 = vrot.lane.b32.xlu0 %v842, 32
        %v851 = vpop.permute.xlu0 %850
        %852 = vrot.lane.b32.xlu0 %v843, 32
        %v853 = vpop.permute.xlu0 %852
        %856 = vrot.lane.b32.xlu0 %v844, 32
        %v857 = vpop.permute.xlu0 %856
        %858 = vrot.lane.b32.xlu0 %v845, 32
        %v859 = vpop.permute.xlu0 %858
        %v860 = vsel %vm418, %v851, 0
        %v862 = vsel %vm418, %v853, 0
        %v864 = vsel %vm418, %v857, 0
        %v866 = vsel %vm418, %v859, 0
        %868 = vmatpush.xpose.msra.mxu0 0.0
        %869 = vmatpush.xpose.msra.mxu0 0.0
        %870 = vmatpush.xpose.msra.mxu0 0.0
        %871 = vmatpush.xpose.msra.mxu0 0.0
        %872 = vmatpush.xpose.msra.mxu0 0.0
        %873 = vmatpush.xpose.msra.mxu0 0.0
        %874 = vmatpush.xpose.msra.mxu0 0.0
        %875 = vmatpush.xpose.msra.mxu0 0.0
        %876 = vmatpush.xpose.msra.mxu0 0.0
        %877 = vmatpush.xpose.msra.mxu0 0.0
        %878 = vmatpush.xpose.msra.mxu0 0.0
        %879 = vmatpush.xpose.msra.mxu0 0.0
        %880 = vmatpush.xpose.msra.mxu0 0.0
        %881 = vmatpush.xpose.msra.mxu0 0.0
        %882 = vmatpush.xpose.msra.mxu0 %v866
        %883 = vmatpush.xpose.msra.mxu0 %v864
        %884 = vmatmul.f32.gmra.mxu0 %v860
        %v885 = vpop.f32.mrf.mxu0
        %v886 = vadd.f32 0.0, %v885
        %887 = vmatmul.f32.gmra.mxu0 %v862
        %v888 = vpop.f32.mrf.mxu0
        %v889 = vadd.f32 0.0, %v888
        %890 = vdwg.mxu0
        %v891 = vmul.f32 %v886, 0.17677669
        %v892 = vmul.f32 %v889, 0.17677669
        %v893 = vsel %vm410, %v891, -1e+30
        %v894 = vsel %vm411, %v892, -1e+30
        %v895 = vsel %vm458, %v893, -inf
        %896 = vmax.xlane.f32.xlu0 %v895
        %v897 = vpop.xlane.xlu0 %896
        %v898 = vsel %vm458, %v894, -inf
        %899 = vmax.xlane.f32.xlu0 %v898
        %v900 = vpop.xlane.xlu0 %899
        %v901 = vsub.f32 %v893, %v897
        %v902 = vsub.f32 %v894, %v900
        %v903 = vmul.f32 %v901, 1.442695
        %v904 = vpow.pop %v903
        %v905 = vmul.f32 %v902, 1.442695
        %v906 = vpow.pop %v905
        %v907 = vsel %vm458, %v904, 0.0
        %908 = vadd.xlane.f32.xlu0 %v907
        %v909 = vpop.xlane.xlu0 %908
        %v910 = vsel %vm458, %v906, 0.0
        %911 = vadd.xlane.f32.xlu0 %v910
        %v912 = vpop.xlane.xlu0 %911
        %v913 = vrcp.pop %v909
        %v914 = vmul.f32 %v909, %v913
        %v915 = vsub.f32 1.0, %v914
        %v916 = vmul.f32 %v913, %v915
        %v917 = vadd.f32 %v913, %v916
        %vm918 = vweird.f32 %v909
        %vm919 = vweird.f32 %v913
        %vm920 = vmor %vm918, %vm919
        %v921 = vsel %vm920, %v913, %v917
        %v922 = vand.u32 2147483647, %v909
        %vm923 = vcmp.eq.f32.partialorder %v922, 8.507059e+37
        %v924 = vand.u32 %v909, 2147483648
        %v925 = vor.u32 1.1754944e-38, %v924
        %v926 = vsel %vm923, %v925, %v921
        %v927 = vmul.f32 1.0, %v926
        %v928 = vrcp.pop %v912
        %v929 = vmul.f32 %v912, %v928
        %v930 = vsub.f32 1.0, %v929
        %v931 = vmul.f32 %v928, %v930
        %v932 = vadd.f32 %v928, %v931
        %vm933 = vweird.f32 %v912
        %vm934 = vweird.f32 %v928
        %vm935 = vmor %vm933, %vm934
        %v936 = vsel %vm935, %v928, %v932
        %v937 = vand.u32 2147483647, %v912
        %vm938 = vcmp.eq.f32.partialorder %v937, 8.507059e+37
        %v939 = vand.u32 %v912, 2147483648
        %v940 = vor.u32 1.1754944e-38, %v939
        %v941 = vsel %vm938, %v940, %v936
        %v942 = vmul.f32 1.0, %v941
        %v943 = vmul.f32 %v904, %v927
        %v944 = vmul.f32 %v906, %v942
        %947 = vrot.lane.b32.xlu0 %v846, 32
        %v948 = vpop.permute.xlu0 %947
        %949 = vrot.lane.b32.xlu0 %v847, 32
        %v950 = vpop.permute.xlu0 %949
        %v954 = vsel %vm458, %v943, 0
        %v957 = vsel %vm458, %v944, 0
        %959 = vmatpush.msra.mxu0 0.0
        %960 = vmatpush.msra.mxu0 0.0
        %961 = vmatpush.msra.mxu0 0.0
        %962 = vmatpush.msra.mxu0 0.0
        %963 = vmatpush.msra.mxu0 0.0
        %964 = vmatpush.msra.mxu0 0.0
        %965 = vmatpush.msra.mxu0 0.0
        %966 = vmatpush.msra.mxu0 0.0
        %967 = vmatpush.msra.mxu0 0.0
        %968 = vmatpush.msra.mxu0 0.0
        %969 = vmatpush.msra.mxu0 0.0
        %970 = vmatpush.msra.mxu0 0.0
        %971 = vmatpush.msra.mxu0 0.0
        %972 = vmatpush.msra.mxu0 0.0
        %973 = vmatpush.msra.mxu0 %v950
        %974 = vmatpush.msra.mxu0 %v948
        %975 = vmatmul.f32.gmra.mxu0 %v954
        %v976 = vpop.f32.mrf.mxu0
        %v977 = vadd.f32 0.0, %v976
        %978 = vmatmul.f32.gmra.mxu0 %v957
        %v979 = vpop.f32.mrf.mxu0
        %v980 = vadd.f32 0.0, %v979
        %981 = vdwg.mxu0
        %984 = vrot.lane.b32.xlu0 %v977, 96
        %v985 = vpop.permute.xlu0 %984
        %986 = vrot.lane.b32.xlu0 %v980, 96
        %v987 = vpop.permute.xlu0 %986
        %vm990 = vcmask 1048320
        %991 = vst.msk [vmem:[#allocation3] sm:$0xff] %vm990, %v985
        %992 = vst.msk [vmem:[#allocation3 + $0x8] sm:$0xff] %vm990, %v987
        %v993 = vld [vmem:[#allocation2 + $0x30] sm:$0xff]
        %v994 = vld [vmem:[#allocation2 + $0x48] sm:$0xff]
        %v995 = vld [vmem:[#allocation2 + $0x38] sm:$0xff]
        %v996 = vld [vmem:[#allocation2 + $0x50] sm:$0xff]
        %v997 = vld [vmem:[#allocation2 + $0x40] sm:$0xff]
        %v998 = vld [vmem:[#allocation2 + $0x58] sm:$0xff]
        %v1000 = vsel %vm418, %v993, 0
        %v1003 = vsel %vm418, %v994, 0
        %v1006 = vsel %vm418, %v995, 0
        %v1009 = vsel %vm418, %v996, 0
        %1011 = vmatpush.xpose.msra.mxu0 0.0
        %1012 = vmatpush.xpose.msra.mxu0 0.0
        %1013 = vmatpush.xpose.msra.mxu0 0.0
        %1014 = vmatpush.xpose.msra.mxu0 0.0
        %1015 = vmatpush.xpose.msra.mxu0 0.0
        %1016 = vmatpush.xpose.msra.mxu0 0.0
        %1017 = vmatpush.xpose.msra.mxu0 0.0
        %1018 = vmatpush.xpose.msra.mxu0 0.0
        %1019 = vmatpush.xpose.msra.mxu0 0.0
        %1020 = vmatpush.xpose.msra.mxu0 0.0
        %1021 = vmatpush.xpose.msra.mxu0 0.0
        %1022 = vmatpush.xpose.msra.mxu0 0.0
        %1023 = vmatpush.xpose.msra.mxu0 0.0
        %1024 = vmatpush.xpose.msra.mxu0 0.0
        %1025 = vmatpush.xpose.msra.mxu0 %v1009
        %1026 = vmatpush.xpose.msra.mxu0 %v1006
        %1027 = vmatmul.f32.gmra.mxu0 %v1000
        %v1028 = vpop.f32.mrf.mxu0
        %v1029 = vadd.f32 0.0, %v1028
        %1030 = vmatmul.f32.gmra.mxu0 %v1003
        %v1031 = vpop.f32.mrf.mxu0
        %v1032 = vadd.f32 0.0, %v1031
        %1033 = vdwg.mxu0
        %v1034 = vmul.f32 %v1029, 0.17677669
        %v1035 = vmul.f32 %v1032, 0.17677669
        %v1036 = vsel %vm410, %v1034, -1e+30
        %v1037 = vsel %vm411, %v1035, -1e+30
        %v1038 = vsel %vm458, %v1036, -inf
        %1039 = vmax.xlane.f32.xlu0 %v1038
        %v1040 = vpop.xlane.xlu0 %1039
        %v1041 = vsel %vm458, %v1037, -inf
        %1042 = vmax.xlane.f32.xlu0 %v1041
        %v1043 = vpop.xlane.xlu0 %1042
        %v1044 = vsub.f32 %v1036, %v1040
        %v1045 = vsub.f32 %v1037, %v1043
        %v1046 = vmul.f32 %v1044, 1.442695
        %v1047 = vpow.pop %v1046
        %v1048 = vmul.f32 %v1045, 1.442695
        %v1049 = vpow.pop %v1048
        %v1050 = vsel %vm458, %v1047, 0.0
        %1051 = vadd.xlane.f32.xlu0 %v1050
        %v1052 = vpop.xlane.xlu0 %1051
        %v1053 = vsel %vm458, %v1049, 0.0
        %1054 = vadd.xlane.f32.xlu0 %v1053
        %v1055 = vpop.xlane.xlu0 %1054
        %v1056 = vrcp.pop %v1052
        %v1057 = vmul.f32 %v1052, %v1056
        %v1058 = vsub.f32 1.0, %v1057
        %v1059 = vmul.f32 %v1056, %v1058
        %v1060 = vadd.f32 %v1056, %v1059
        %vm1061 = vweird.f32 %v1052
        %vm1062 = vweird.f32 %v1056
        %vm1063 = vmor %vm1061, %vm1062
        %v1064 = vsel %vm1063, %v1056, %v1060
        %v1065 = vand.u32 2147483647, %v1052
        %vm1066 = vcmp.eq.f32.partialorder %v1065, 8.507059e+37
        %v1067 = vand.u32 %v1052, 2147483648
        %v1068 = vor.u32 1.1754944e-38, %v1067
        %v1069 = vsel %vm1066, %v1068, %v1064
        %v1070 = vmul.f32 1.0, %v1069
        %v1071 = vrcp.pop %v1055
        %v1072 = vmul.f32 %v1055, %v1071
        %v1073 = vsub.f32 1.0, %v1072
        %v1074 = vmul.f32 %v1071, %v1073
        %v1075 = vadd.f32 %v1071, %v1074
        %vm1076 = vweird.f32 %v1055
        %vm1077 = vweird.f32 %v1071
        %vm1078 = vmor %vm1076, %vm1077
        %v1079 = vsel %vm1078, %v1071, %v1075
        %v1080 = vand.u32 2147483647, %v1055
        %vm1081 = vcmp.eq.f32.partialorder %v1080, 8.507059e+37
        %v1082 = vand.u32 %v1055, 2147483648
        %v1083 = vor.u32 1.1754944e-38, %v1082
        %v1084 = vsel %vm1081, %v1083, %v1079
        %v1085 = vmul.f32 1.0, %v1084
        %v1086 = vmul.f32 %v1047, %v1070
        %v1087 = vmul.f32 %v1049, %v1085
        %v1089 = vsel %vm458, %v1086, 0
        %v1092 = vsel %vm458, %v1087, 0
        %1094 = vmatpush.msra.mxu0 0.0
        %1095 = vmatpush.msra.mxu0 0.0
        %1096 = vmatpush.msra.mxu0 0.0
        %1097 = vmatpush.msra.mxu0 0.0
        %1098 = vmatpush.msra.mxu0 0.0
        %1099 = vmatpush.msra.mxu0 0.0
        %1100 = vmatpush.msra.mxu0 0.0
        %1101 = vmatpush.msra.mxu0 0.0
        %1102 = vmatpush.msra.mxu0 0.0
        %1103 = vmatpush.msra.mxu0 0.0
        %1104 = vmatpush.msra.mxu0 0.0
        %1105 = vmatpush.msra.mxu0 0.0
        %1106 = vmatpush.msra.mxu0 0.0
        %1107 = vmatpush.msra.mxu0 0.0
        %1108 = vmatpush.msra.mxu0 %v998
        %1109 = vmatpush.msra.mxu0 %v997
        %1110 = vmatmul.f32.gmra.mxu0 %v1089
        %v1111 = vpop.f32.mrf.mxu0
        %v1112 = vadd.f32 0.0, %v1111
        %1113 = vmatmul.f32.gmra.mxu0 %v1092
        %v1114 = vpop.f32.mrf.mxu0
        %v1115 = vadd.f32 0.0, %v1114
        %1116 = vdwg.mxu0
        %1117 = vst.msk [vmem:[#allocation3 + $0x10] sm:$0xff] %vm418, %v1112
        %1118 = vst.msk [vmem:[#allocation3 + $0x18] sm:$0xff] %vm418, %v1115
        %v1119 = vld [vmem:[#allocation2 + $0x30] sm:$0xff]
        %v1120 = vld [vmem:[#allocation2 + $0x48] sm:$0xff]
        %v1121 = vld [vmem:[#allocation2 + $0x38] sm:$0xff]
        %v1122 = vld [vmem:[#allocation2 + $0x50] sm:$0xff]
        %v1123 = vld [vmem:[#allocation2 + $0x40] sm:$0xff]
        %v1124 = vld [vmem:[#allocation2 + $0x58] sm:$0xff]
        %1127 = vrot.lane.b32.xlu0 %v1119, 96
        %v1128 = vpop.permute.xlu0 %1127
        %1129 = vrot.lane.b32.xlu0 %v1120, 96
        %v1130 = vpop.permute.xlu0 %1129
        %1133 = vrot.lane.b32.xlu0 %v1121, 96
        %v1134 = vpop.permute.xlu0 %1133
        %1135 = vrot.lane.b32.xlu0 %v1122, 96
        %v1136 = vpop.permute.xlu0 %1135
        %v1137 = vsel %vm418, %v1128, 0
        %v1139 = vsel %vm418, %v1130, 0
        %v1141 = vsel %vm418, %v1134, 0
        %v1143 = vsel %vm418, %v1136, 0
        %1145 = vmatpush.xpose.msra.mxu0 0.0
        %1146 = vmatpush.xpose.msra.mxu0 0.0
        %1147 = vmatpush.xpose.msra.mxu0 0.0
        %1148 = vmatpush.xpose.msra.mxu0 0.0
        %1149 = vmatpush.xpose.msra.mxu0 0.0
        %1150 = vmatpush.xpose.msra.mxu0 0.0
        %1151 = vmatpush.xpose.msra.mxu0 0.0
        %1152 = vmatpush.xpose.msra.mxu0 0.0
        %1153 = vmatpush.xpose.msra.mxu0 0.0
        %1154 = vmatpush.xpose.msra.mxu0 0.0
        %1155 = vmatpush.xpose.msra.mxu0 0.0
        %1156 = vmatpush.xpose.msra.mxu0 0.0
        %1157 = vmatpush.xpose.msra.mxu0 0.0
        %1158 = vmatpush.xpose.msra.mxu0 0.0
        %1159 = vmatpush.xpose.msra.mxu0 %v1143
        %1160 = vmatpush.xpose.msra.mxu0 %v1141
        %1161 = vmatmul.f32.gmra.mxu0 %v1137
        %v1162 = vpop.f32.mrf.mxu0
        %v1163 = vadd.f32 0.0, %v1162
        %1164 = vmatmul.f32.gmra.mxu0 %v1139
        %v1165 = vpop.f32.mrf.mxu0
        %v1166 = vadd.f32 0.0, %v1165
        %1167 = vdwg.mxu0
        %v1168 = vmul.f32 %v1163, 0.17677669
        %v1169 = vmul.f32 %v1166, 0.17677669
        %v1170 = vsel %vm410, %v1168, -1e+30
        %v1171 = vsel %vm411, %v1169, -1e+30
        %v1172 = vsel %vm458, %v1170, -inf
        %1173 = vmax.xlane.f32.xlu0 %v1172
        %v1174 = vpop.xlane.xlu0 %1173
        %v1175 = vsel %vm458, %v1171, -inf
        %1176 = vmax.xlane.f32.xlu0 %v1175
        %v1177 = vpop.xlane.xlu0 %1176
        %v1178 = vsub.f32 %v1170, %v1174
        %v1179 = vsub.f32 %v1171, %v1177
        %v1180 = vmul.f32 %v1178, 1.442695
        %v1181 = vpow.pop %v1180
        %v1182 = vmul.f32 %v1179, 1.442695
        %v1183 = vpow.pop %v1182
        %v1184 = vsel %vm458, %v1181, 0.0
        %1185 = vadd.xlane.f32.xlu0 %v1184
        %v1186 = vpop.xlane.xlu0 %1185
        %v1187 = vsel %vm458, %v1183, 0.0
        %1188 = vadd.xlane.f32.xlu0 %v1187
        %v1189 = vpop.xlane.xlu0 %1188
        %v1190 = vrcp.pop %v1186
        %v1191 = vmul.f32 %v1186, %v1190
        %v1192 = vsub.f32 1.0, %v1191
        %v1193 = vmul.f32 %v1190, %v1192
        %v1194 = vadd.f32 %v1190, %v1193
        %vm1195 = vweird.f32 %v1186
        %vm1196 = vweird.f32 %v1190
        %vm1197 = vmor %vm1195, %vm1196
        %v1198 = vsel %vm1197, %v1190, %v1194
        %v1199 = vand.u32 2147483647, %v1186
        %vm1200 = vcmp.eq.f32.partialorder %v1199, 8.507059e+37
        %v1201 = vand.u32 %v1186, 2147483648
        %v1202 = vor.u32 1.1754944e-38, %v1201
        %v1203 = vsel %vm1200, %v1202, %v1198
        %v1204 = vmul.f32 1.0, %v1203
        %v1205 = vrcp.pop %v1189
        %v1206 = vmul.f32 %v1189, %v1205
        %v1207 = vsub.f32 1.0, %v1206
        %v1208 = vmul.f32 %v1205, %v1207
        %v1209 = vadd.f32 %v1205, %v1208
        %vm1210 = vweird.f32 %v1189
        %vm1211 = vweird.f32 %v1205
        %vm1212 = vmor %vm1210, %vm1211
        %v1213 = vsel %vm1212, %v1205, %v1209
        %v1214 = vand.u32 2147483647, %v1189
        %vm1215 = vcmp.eq.f32.partialorder %v1214, 8.507059e+37
        %v1216 = vand.u32 %v1189, 2147483648
        %v1217 = vor.u32 1.1754944e-38, %v1216
        %v1218 = vsel %vm1215, %v1217, %v1213
        %v1219 = vmul.f32 1.0, %v1218
        %v1220 = vmul.f32 %v1181, %v1204
        %v1221 = vmul.f32 %v1183, %v1219
        %1224 = vrot.lane.b32.xlu0 %v1123, 96
        %v1225 = vpop.permute.xlu0 %1224
        %1226 = vrot.lane.b32.xlu0 %v1124, 96
        %v1227 = vpop.permute.xlu0 %1226
        %v1231 = vsel %vm458, %v1220, 0
        %v1234 = vsel %vm458, %v1221, 0
        %1236 = vmatpush.msra.mxu0 0.0
        %1237 = vmatpush.msra.mxu0 0.0
        %1238 = vmatpush.msra.mxu0 0.0
        %1239 = vmatpush.msra.mxu0 0.0
        %1240 = vmatpush.msra.mxu0 0.0
        %1241 = vmatpush.msra.mxu0 0.0
        %1242 = vmatpush.msra.mxu0 0.0
        %1243 = vmatpush.msra.mxu0 0.0
        %1244 = vmatpush.msra.mxu0 0.0
        %1245 = vmatpush.msra.mxu0 0.0
        %1246 = vmatpush.msra.mxu0 0.0
        %1247 = vmatpush.msra.mxu0 0.0
        %1248 = vmatpush.msra.mxu0 0.0
        %1249 = vmatpush.msra.mxu0 0.0
        %1250 = vmatpush.msra.mxu0 %v1227
        %1251 = vmatpush.msra.mxu0 %v1225
        %1252 = vmatmul.f32.gmra.mxu0 %v1231
        %v1253 = vpop.f32.mrf.mxu0
        %v1254 = vadd.f32 0.0, %v1253
        %1255 = vmatmul.f32.gmra.mxu0 %v1234
        %v1256 = vpop.f32.mrf.mxu0
        %v1257 = vadd.f32 0.0, %v1256
        %1258 = vdwg.mxu0
        %1261 = vrot.lane.b32.xlu0 %v1254, 32
        %v1262 = vpop.permute.xlu0 %1261
        %1263 = vrot.lane.b32.xlu0 %v1257, 32
        %v1264 = vpop.permute.xlu0 %1263
        %1267 = vst.msk [vmem:[#allocation3 + $0x10] sm:$0xff] %vm688, %v1262
        %1268 = vst.msk [vmem:[#allocation3 + $0x18] sm:$0xff] %vm688, %v1264
        %v1269 = vld [vmem:[#allocation2 + $0x30] sm:$0xff]
        %v1270 = vld [vmem:[#allocation2 + $0x48] sm:$0xff]
        %v1271 = vld [vmem:[#allocation2 + $0x38] sm:$0xff]
        %v1272 = vld [vmem:[#allocation2 + $0x50] sm:$0xff]
        %v1273 = vld [vmem:[#allocation2 + $0x40] sm:$0xff]
        %v1274 = vld [vmem:[#allocation2 + $0x58] sm:$0xff]
        %1277 = vrot.lane.b32.xlu0 %v1269, 64
        %v1278 = vpop.permute.xlu0 %1277
        %1279 = vrot.lane.b32.xlu0 %v1270, 64
        %v1280 = vpop.permute.xlu0 %1279
        %1283 = vrot.lane.b32.xlu0 %v1271, 64
        %v1284 = vpop.permute.xlu0 %1283
        %1285 = vrot.lane.b32.xlu0 %v1272, 64
        %v1286 = vpop.permute.xlu0 %1285
        %v1287 = vsel %vm418, %v1278, 0
        %v1289 = vsel %vm418, %v1280, 0
        %v1291 = vsel %vm418, %v1284, 0
        %v1293 = vsel %vm418, %v1286, 0
        %1295 = vmatpush.xpose.msra.mxu0 0.0
        %1296 = vmatpush.xpose.msra.mxu0 0.0
        %1297 = vmatpush.xpose.msra.mxu0 0.0
        %1298 = vmatpush.xpose.msra.mxu0 0.0
        %1299 = vmatpush.xpose.msra.mxu0 0.0
        %1300 = vmatpush.xpose.msra.mxu0 0.0
        %1301 = vmatpush.xpose.msra.mxu0 0.0
        %1302 = vmatpush.xpose.msra.mxu0 0.0
        %1303 = vmatpush.xpose.msra.mxu0 0.0
        %1304 = vmatpush.xpose.msra.mxu0 0.0
        %1305 = vmatpush.xpose.msra.mxu0 0.0
        %1306 = vmatpush.xpose.msra.mxu0 0.0
        %1307 = vmatpush.xpose.msra.mxu0 0.0
        %1308 = vmatpush.xpose.msra.mxu0 0.0
        %1309 = vmatpush.xpose.msra.mxu0 %v1293
        %1310 = vmatpush.xpose.msra.mxu0 %v1291
        %1311 = vmatmul.f32.gmra.mxu0 %v1287
        %v1312 = vpop.f32.mrf.mxu0
        %v1313 = vadd.f32 0.0, %v1312
        %1314 = vmatmul.f32.gmra.mxu0 %v1289
        %v1315 = vpop.f32.mrf.mxu0
        %v1316 = vadd.f32 0.0, %v1315
        %1317 = vdwg.mxu0
        %v1318 = vmul.f32 %v1313, 0.17677669
        %v1319 = vmul.f32 %v1316, 0.17677669
        %v1320 = vsel %vm410, %v1318, -1e+30
        %v1321 = vsel %vm411, %v1319, -1e+30
        %v1322 = vsel %vm458, %v1320, -inf
        %1323 = vmax.xlane.f32.xlu0 %v1322
        %v1324 = vpop.xlane.xlu0 %1323
        %v1325 = vsel %vm458, %v1321, -inf
        %1326 = vmax.xlane.f32.xlu0 %v1325
        %v1327 = vpop.xlane.xlu0 %1326
        %v1328 = vsub.f32 %v1320, %v1324
        %v1329 = vsub.f32 %v1321, %v1327
        %v1330 = vmul.f32 %v1328, 1.442695
        %v1331 = vpow.pop %v1330
        %v1332 = vmul.f32 %v1329, 1.442695
        %v1333 = vpow.pop %v1332
        %v1334 = vsel %vm458, %v1331, 0.0
        %1335 = vadd.xlane.f32.xlu0 %v1334
        %v1336 = vpop.xlane.xlu0 %1335
        %v1337 = vsel %vm458, %v1333, 0.0
        %1338 = vadd.xlane.f32.xlu0 %v1337
        %v1339 = vpop.xlane.xlu0 %1338
        %v1340 = vrcp.pop %v1336
        %v1341 = vmul.f32 %v1336, %v1340
        %v1342 = vsub.f32 1.0, %v1341
        %v1343 = vmul.f32 %v1340, %v1342
        %v1344 = vadd.f32 %v1340, %v1343
        %vm1345 = vweird.f32 %v1336
        %vm1346 = vweird.f32 %v1340
        %vm1347 = vmor %vm1345, %vm1346
        %v1348 = vsel %vm1347, %v1340, %v1344
        %v1349 = vand.u32 2147483647, %v1336
        %vm1350 = vcmp.eq.f32.partialorder %v1349, 8.507059e+37
        %v1351 = vand.u32 %v1336, 2147483648
        %v1352 = vor.u32 1.1754944e-38, %v1351
        %v1353 = vsel %vm1350, %v1352, %v1348
        %v1354 = vmul.f32 1.0, %v1353
        %v1355 = vrcp.pop %v1339
        %v1356 = vmul.f32 %v1339, %v1355
        %v1357 = vsub.f32 1.0, %v1356
        %v1358 = vmul.f32 %v1355, %v1357
        %v1359 = vadd.f32 %v1355, %v1358
        %vm1360 = vweird.f32 %v1339
        %vm1361 = vweird.f32 %v1355
        %vm1362 = vmor %vm1360, %vm1361
        %v1363 = vsel %vm1362, %v1355, %v1359
        %v1364 = vand.u32 2147483647, %v1339
        %vm1365 = vcmp.eq.f32.partialorder %v1364, 8.507059e+37
        %v1366 = vand.u32 %v1339, 2147483648
        %v1367 = vor.u32 1.1754944e-38, %v1366
        %v1368 = vsel %vm1365, %v1367, %v1363
        %v1369 = vmul.f32 1.0, %v1368
        %v1370 = vmul.f32 %v1331, %v1354
        %v1371 = vmul.f32 %v1333, %v1369
        %1374 = vrot.lane.b32.xlu0 %v1273, 64
        %v1375 = vpop.permute.xlu0 %1374
        %1376 = vrot.lane.b32.xlu0 %v1274, 64
        %v1377 = vpop.permute.xlu0 %1376
        %v1381 = vsel %vm458, %v1370, 0
        %v1384 = vsel %vm458, %v1371, 0
        %1386 = vmatpush.msra.mxu0 0.0
        %1387 = vmatpush.msra.mxu0 0.0
        %1388 = vmatpush.msra.mxu0 0.0
        %1389 = vmatpush.msra.mxu0 0.0
        %1390 = vmatpush.msra.mxu0 0.0
        %1391 = vmatpush.msra.mxu0 0.0
        %1392 = vmatpush.msra.mxu0 0.0
        %1393 = vmatpush.msra.mxu0 0.0
        %1394 = vmatpush.msra.mxu0 0.0
        %1395 = vmatpush.msra.mxu0 0.0
        %1396 = vmatpush.msra.mxu0 0.0
        %1397 = vmatpush.msra.mxu0 0.0
        %1398 = vmatpush.msra.mxu0 0.0
        %1399 = vmatpush.msra.mxu0 0.0
        %1400 = vmatpush.msra.mxu0 %v1377
        %1401 = vmatpush.msra.mxu0 %v1375
        %1402 = vmatmul.f32.gmra.mxu0 %v1381
        %v1403 = vpop.f32.mrf.mxu0
        %v1404 = vadd.f32 0.0, %v1403
        %1405 = vmatmul.f32.gmra.mxu0 %v1384
        %v1406 = vpop.f32.mrf.mxu0
        %v1407 = vadd.f32 0.0, %v1406
        %1408 = vdwg.mxu0
        %1411 = vrot.lane.b32.xlu0 %v1404, 64
        %v1412 = vpop.permute.xlu0 %1411
        %1413 = vrot.lane.b32.xlu0 %v1407, 64
        %v1414 = vpop.permute.xlu0 %1413
        %1417 = vst.msk [vmem:[#allocation3 + $0x10] sm:$0xff] %vm839, %v1412
        %1418 = vst.msk [vmem:[#allocation3 + $0x18] sm:$0xff] %vm839, %v1414
        %v1419 = vld [vmem:[#allocation2 + $0x30] sm:$0xff]
        %v1420 = vld [vmem:[#allocation2 + $0x48] sm:$0xff]
        %v1421 = vld [vmem:[#allocation2 + $0x38] sm:$0xff]
        %v1422 = vld [vmem:[#allocation2 + $0x50] sm:$0xff]
        %v1423 = vld [vmem:[#allocation2 + $0x40] sm:$0xff]
        %v1424 = vld [vmem:[#allocation2 + $0x58] sm:$0xff]
        %1427 = vrot.lane.b32.xlu0 %v1419, 32
        %v1428 = vpop.permute.xlu0 %1427
        %1429 = vrot.lane.b32.xlu0 %v1420, 32
        %v1430 = vpop.permute.xlu0 %1429
        %1433 = vrot.lane.b32.xlu0 %v1421, 32
        %v1434 = vpop.permute.xlu0 %1433
        %1435 = vrot.lane.b32.xlu0 %v1422, 32
        %v1436 = vpop.permute.xlu0 %1435
        %v1437 = vsel %vm418, %v1428, 0
        %v1439 = vsel %vm418, %v1430, 0
        %v1441 = vsel %vm418, %v1434, 0
        %v1443 = vsel %vm418, %v1436, 0
        %1445 = vmatpush.xpose.msra.mxu0 0.0
        %1446 = vmatpush.xpose.msra.mxu0 0.0
        %1447 = vmatpush.xpose.msra.mxu0 0.0
        %1448 = vmatpush.xpose.msra.mxu0 0.0
        %1449 = vmatpush.xpose.msra.mxu0 0.0
        %1450 = vmatpush.xpose.msra.mxu0 0.0
        %1451 = vmatpush.xpose.msra.mxu0 0.0
        %1452 = vmatpush.xpose.msra.mxu0 0.0
        %1453 = vmatpush.xpose.msra.mxu0 0.0
        %1454 = vmatpush.xpose.msra.mxu0 0.0
        %1455 = vmatpush.xpose.msra.mxu0 0.0
        %1456 = vmatpush.xpose.msra.mxu0 0.0
        %1457 = vmatpush.xpose.msra.mxu0 0.0
        %1458 = vmatpush.xpose.msra.mxu0 0.0
        %1459 = vmatpush.xpose.msra.mxu0 %v1443
        %1460 = vmatpush.xpose.msra.mxu0 %v1441
        %1461 = vmatmul.f32.gmra.mxu0 %v1437
        %v1462 = vpop.f32.mrf.mxu0
        %v1463 = vadd.f32 0.0, %v1462
        %1464 = vmatmul.f32.gmra.mxu0 %v1439
        %v1465 = vpop.f32.mrf.mxu0
        %v1466 = vadd.f32 0.0, %v1465
        %1467 = vdwg.mxu0
        %v1468 = vmul.f32 %v1463, 0.17677669
        %v1469 = vmul.f32 %v1466, 0.17677669
        %v1470 = vsel %vm410, %v1468, -1e+30
        %v1471 = vsel %vm411, %v1469, -1e+30
        %v1472 = vsel %vm458, %v1470, -inf
        %1473 = vmax.xlane.f32.xlu0 %v1472
        %v1474 = vpop.xlane.xlu0 %1473
        %v1475 = vsel %vm458, %v1471, -inf
        %1476 = vmax.xlane.f32.xlu0 %v1475
        %v1477 = vpop.xlane.xlu0 %1476
        %v1478 = vsub.f32 %v1470, %v1474
        %v1479 = vsub.f32 %v1471, %v1477
        %v1480 = vmul.f32 %v1478, 1.442695
        %v1481 = vpow.pop %v1480
        %v1482 = vmul.f32 %v1479, 1.442695
        %v1483 = vpow.pop %v1482
        %v1484 = vsel %vm458, %v1481, 0.0
        %1485 = vadd.xlane.f32.xlu0 %v1484
        %v1486 = vpop.xlane.xlu0 %1485
        %v1487 = vsel %vm458, %v1483, 0.0
        %1488 = vadd.xlane.f32.xlu0 %v1487
        %v1489 = vpop.xlane.xlu0 %1488
        %v1490 = vrcp.pop %v1486
        %v1491 = vmul.f32 %v1486, %v1490
        %v1492 = vsub.f32 1.0, %v1491
        %v1493 = vmul.f32 %v1490, %v1492
        %v1494 = vadd.f32 %v1490, %v1493
        %vm1495 = vweird.f32 %v1486
        %vm1496 = vweird.f32 %v1490
        %vm1497 = vmor %vm1495, %vm1496
        %v1498 = vsel %vm1497, %v1490, %v1494
        %v1499 = vand.u32 2147483647, %v1486
        %vm1500 = vcmp.eq.f32.partialorder %v1499, 8.507059e+37
        %v1501 = vand.u32 %v1486, 2147483648
        %v1502 = vor.u32 1.1754944e-38, %v1501
        %v1503 = vsel %vm1500, %v1502, %v1498
        %v1504 = vmul.f32 1.0, %v1503
        %v1505 = vrcp.pop %v1489
        %v1506 = vmul.f32 %v1489, %v1505
        %v1507 = vsub.f32 1.0, %v1506
        %v1508 = vmul.f32 %v1505, %v1507
        %v1509 = vadd.f32 %v1505, %v1508
        %vm1510 = vweird.f32 %v1489
        %vm1511 = vweird.f32 %v1505
        %vm1512 = vmor %vm1510, %vm1511
        %v1513 = vsel %vm1512, %v1505, %v1509
        %v1514 = vand.u32 2147483647, %v1489
        %vm1515 = vcmp.eq.f32.partialorder %v1514, 8.507059e+37
        %v1516 = vand.u32 %v1489, 2147483648
        %v1517 = vor.u32 1.1754944e-38, %v1516
        %v1518 = vsel %vm1515, %v1517, %v1513
        %v1519 = vmul.f32 1.0, %v1518
        %v1520 = vmul.f32 %v1481, %v1504
        %v1521 = vmul.f32 %v1483, %v1519
        %1524 = vrot.lane.b32.xlu0 %v1423, 32
        %v1525 = vpop.permute.xlu0 %1524
        %1526 = vrot.lane.b32.xlu0 %v1424, 32
        %v1527 = vpop.permute.xlu0 %1526
        %v1531 = vsel %vm458, %v1520, 0
        %v1534 = vsel %vm458, %v1521, 0
        %1536 = vmatpush.msra.mxu0 0.0
        %1537 = vmatpush.msra.mxu0 0.0
        %1538 = vmatpush.msra.mxu0 0.0
        %1539 = vmatpush.msra.mxu0 0.0
        %1540 = vmatpush.msra.mxu0 0.0
        %1541 = vmatpush.msra.mxu0 0.0
        %1542 = vmatpush.msra.mxu0 0.0
        %1543 = vmatpush.msra.mxu0 0.0
        %1544 = vmatpush.msra.mxu0 0.0
        %1545 = vmatpush.msra.mxu0 0.0
        %1546 = vmatpush.msra.mxu0 0.0
        %1547 = vmatpush.msra.mxu0 0.0
        %1548 = vmatpush.msra.mxu0 0.0
        %1549 = vmatpush.msra.mxu0 0.0
        %1550 = vmatpush.msra.mxu0 %v1527
        %1551 = vmatpush.msra.mxu0 %v1525
        %1552 = vmatmul.f32.gmra.mxu0 %v1531
        %v1553 = vpop.f32.mrf.mxu0
        %v1554 = vadd.f32 0.0, %v1553
        %1555 = vmatmul.f32.gmra.mxu0 %v1534
        %v1556 = vpop.f32.mrf.mxu0
        %v1557 = vadd.f32 0.0, %v1556
        %1558 = vdwg.mxu0
        %1561 = vrot.lane.b32.xlu0 %v1554, 96
        %v1562 = vpop.permute.xlu0 %1561
        %1563 = vrot.lane.b32.xlu0 %v1557, 96
        %v1564 = vpop.permute.xlu0 %1563
        %1567 = vst.msk [vmem:[#allocation3 + $0x10] sm:$0xff] %vm990, %v1562
        %1568 = vst.msk [vmem:[#allocation3 + $0x18] sm:$0xff] %vm990, %v1564
        %v1569 = vld [vmem:[#allocation3] sm:$0xff]
        %v1570 = vld [vmem:[#allocation3 + $0x8] sm:$0xff]
        %v1571 = vld [vmem:[#allocation3 + $0x10] sm:$0xff]
        %v1572 = vld [vmem:[#allocation3 + $0x18] sm:$0xff]
        %v1573 = vld [vmem:[#allocation9] sm:$0xff]
        %v1574 = vld [vmem:[#allocation9 + $0x8] sm:$0xff]
        %v1575 = vld [vmem:[#allocation9 + $0x10] sm:$0xff]
        %v1576 = vld [vmem:[#allocation9 + $0x18] sm:$0xff]
        %v1577 = vld [vmem:[#allocation9 + $0x20] sm:$0xff]
        %v1578 = vld [vmem:[#allocation9 + $0x28] sm:$0xff]
        %v1579 = vld [vmem:[#allocation9 + $0x30] sm:$0xff]
        %v1580 = vld [vmem:[#allocation9 + $0x38] sm:$0xff]
        %v1581 = vld [vmem:[#allocation9 + $0x40] sm:$0xff]
        %v1582 = vld [vmem:[#allocation9 + $0x48] sm:$0xff]
        %v1583 = vld [vmem:[#allocation9 + $0x50] sm:$0xff]
        %v1584 = vld [vmem:[#allocation9 + $0x58] sm:$0xff]
        %v1585 = vld [vmem:[#allocation9 + $0x60] sm:$0xff]
        %v1586 = vld [vmem:[#allocation9 + $0x68] sm:$0xff]
        %v1587 = vld [vmem:[#allocation9 + $0x70] sm:$0xff]
        %v1588 = vld [vmem:[#allocation9 + $0x78] sm:$0xff]
        %v1589 = vld [vmem:[%s3] sm:$0x1]
        %v1591 = vperm.slane %v1589, 0
        %1593 = vmatpush.msra.mxu0 %v1588
        %1594 = vmatpush.msra.mxu0 %v1587
        %1595 = vmatpush.msra.mxu0 %v1586
        %1596 = vmatpush.msra.mxu0 %v1585
        %1597 = vmatpush.msra.mxu0 %v1584
        %1598 = vmatpush.msra.mxu0 %v1583
        %1599 = vmatpush.msra.mxu0 %v1582
        %1600 = vmatpush.msra.mxu0 %v1581
        %1601 = vmatpush.msra.mxu0 %v1580
        %1602 = vmatpush.msra.mxu0 %v1579
        %1603 = vmatpush.msra.mxu0 %v1578
        %1604 = vmatpush.msra.mxu0 %v1577
        %1605 = vmatpush.msra.mxu0 %v1576
        %1606 = vmatpush.msra.mxu0 %v1575
        %1607 = vmatpush.msra.mxu0 %v1574
        %1608 = vmatpush.msra.mxu0 %v1573
        %1609 = vmatmul.f32.gmra.mxu0 %v1569
        %v1610 = vpop.f32.mrf.mxu0
        %v1611 = vadd.f32 %v1591, %v1610
        %1612 = vmatmul.f32.gmra.mxu0 %v1570
        %v1613 = vpop.f32.mrf.mxu0
        %v1614 = vadd.f32 %v1591, %v1613
        %1615 = vmatmul.f32.gmra.mxu0 %v1571
        %v1616 = vpop.f32.mrf.mxu0
        %v1617 = vadd.f32 %v1591, %v1616
        %1618 = vmatmul.f32.gmra.mxu0 %v1572
        %v1619 = vpop.f32.mrf.mxu0
        %v1620 = vadd.f32 %v1591, %v1619
        %1621 = vdwg.mxu0
        %1622 = vst [vmem:[%s251] sm:$0xff] %v1611
        %1623 = vst [vmem:[%s251 + $0x8] sm:$0xff] %v1614
        %1624 = vst [vmem:[%s251 + $0x10] sm:$0xff] %v1617
        %1625 = vst [vmem:[%s251 + $0x18] sm:$0xff] %v1620
        %s1626 = sand.u32 %s119, 1
        %s1627 = scalar_lea.sflag [#allocation6], %s1626
        %s1628 = sand.u32 %s119, 1
        %s1629 = smul.addr %s1628, 32
        %s1630 = scalar_lea.vmem [#allocation10], %s1629
        // Predicated region
        $region49: #{multi_head_attention.1} parent=35 // pred_check
          %p1631 = pneg %p129
        $region50: #{multi_head_attention.1} parent=35 // pred_check_branch
          %1633 = sbr.rel (%p1631) target = $region52
        $region51: #{multi_head_attention.1} parent=35 // pred_region
          %s1634 = smul.u32 2, %s22
          %1636 = vsyncadd %s1627, 0
          %s1637 = smul.addr %s1634, 2
          %s1638 = smul.addr %s1637, 8
          %s1639 = scalar_lea.hbm %s4, %s1638
          %s1640 = sshll.u32 %s1630, 4
          %s1641 = int_to_ptr.vmem [resolvable:$true] %s1640
          %s1642 = sshll.u32 %s1639, 4
          %s1643 = int_to_ptr.hbm [resolvable:$true] %s1642
          %1648 = dma.vmem_to_hbm [thread:$0]  %s1641, 512, %s1643, %s1627, 128, 128, 8
        $region52: #{multi_head_attention.1} parent=35 // pred_fallthru
          _
      $region36: #{multi_head_attention.1} parent=5 // pred_fallthru
        _
      %p1649 = scmp.le.s32.totalorder 2, %s17
      // Predicated region
      $region53: #{multi_head_attention.1} parent=5 // pred_check
        %p1650 = pneg %p1649
      $region54: #{multi_head_attention.1} parent=5 // pred_check_branch
        %1652 = sbr.rel (%p1650) target = $region56
      $region55: #{multi_head_attention.1} parent=5 // pred_region
        %s1653 = ssub.s32 %s17, 2
        // Predicated region
        $region57: #{multi_head_attention.1} parent=55 // pred_check
          %p1654 = pneg %p135
        $region58: #{multi_head_attention.1} parent=55 // pred_check_branch
          %1656 = sbr.rel (%p1654) target = $region60
        $region59: #{multi_head_attention.1} parent=55 // pred_region
          %s1657 = sand.u32 %s120, 1
          %s1658 = scalar_lea.sflag [#allocation6], %s1657
          %s1659 = sand.u32 %s120, 1
          %s1660 = smul.addr %s1659, 32
          %s1661 = scalar_lea.vmem [#allocation10], %s1660
          %1663 = dma.done %s1658, 512
        $region60: #{multi_head_attention.1} parent=55 // pred_fallthru
          _
      $region56: #{multi_head_attention.1} parent=5 // pred_fallthru
        _
    $region6: #{multi_head_attention.1} parent=1 // loop_footer
      %s21 = sadd.s32 1, %s17
    $region7: #{multi_head_attention.1} parent=1 // loop_footer_branch
      %16 = sbr.rel target = $region3
    $region8: #{multi_head_attention.1} parent=1 // loop_exit
      _
    %1664 = vsyncpa [#allocation5], 1
    %s1665 = scalar_lea.sflag [#allocation5], 1
    %1666 = vsyncpa %s1665, 1
    %1667 = vsyncpa [#allocation8], 1
    %1668 = vsyncpa [#allocation6], 1
    %s1669 = scalar_lea.sflag [#allocation6], 1
    %1670 = vsyncpa %s1669, 1

</llo_original>
